<compile_context>
chip_gen: v5e
topology: v5e:2x2
jax: 0.10.0
libtpu: 0.0.40
codegen_flags: <defaults>
</compile_context>

<pallas_src>
import functools
import math

import jax
import jax.numpy as jnp
from jax.experimental import pallas as pl
from jax.experimental.pallas import tpu as pltpu  # noqa: F401  (TPU backend)

LANES = 128       # every feature dim is zero-padded to a full vreg lane width
SCORE_COL = 32    # unused lane column (>= hidden) carrying the TopK score


# ---------------------------------------------------------------------------
# helpers
# ---------------------------------------------------------------------------
def _full_spec(shape):
    ndim = len(shape)
    return pl.BlockSpec(shape, lambda: (0,) * ndim)


def _gcn_aggregate(a, xw, b, relu):
    """Improved-GCN aggregation D^-1/2 (A + 2I) D^-1/2 @ XW + b.

    `a` is a symmetric, zero-diagonal dense adjacency (f32).  The D^-1/2
    normalization is folded onto the feature side (row/col degrees coincide),
    and the +2I self-loop contribution is applied elementwise on XW rows.
    """
    deg = jnp.sum(a, axis=1, keepdims=True) + 2.0          # (n, 1)
    dinv = jax.lax.rsqrt(deg)                              # deg >= 2 always
    out = dinv * jnp.dot(a, dinv * xw, preferred_element_type=jnp.float32)
    out = out + (2.0 * dinv * dinv) * xw + b
    if relu:
        out = jnp.maximum(out, 0.0)
    return out


def _conv_score(a, x, w, b, p_hat):
    """GCNConv(improved)+ReLU, then TopK score packed into column SCORE_COL."""
    xw = jnp.dot(x, w, preferred_element_type=jnp.float32)
    h = _gcn_aggregate(a, xw, b, relu=True)                       # (n, LANES)
    # score = tanh(h . p / ||p||), p_hat pre-normalized on host; VPU reduce
    score = jnp.tanh(jnp.sum(h * p_hat, axis=1, keepdims=True))   # (n, 1)
    col = jax.lax.broadcasted_iota(jnp.int32, h.shape, 1)
    return jnp.where(col == SCORE_COL, score, h)


# ---------------------------------------------------------------------------
# fused Pallas kernels
# ---------------------------------------------------------------------------
def _down0_kernel(a_ref, x_ref, w_ref, b_ref, p_ref, out_ref):
    """Level-0: GCNConv(improved)+ReLU + TopK scoring (score packed)."""
    out_ref[...] = _conv_score(a_ref[...], x_ref[...], w_ref[...],
                               b_ref[...], p_ref[...])


def _down1_kernel(ar_ref, ac_ref, asel_ref, x_ref, w_ref, b_ref, p_ref,
                  out_ref, a_out_ref):
    """Level-1: post-topk augment_adj restricted to selected nodes, then
    GCNConv(improved)+ReLU + TopK scoring."""
    # a1 = offdiag( (A^2)[perm,perm] + 2*A[perm,perm] )  -- (k1,N)@(N,k1) only
    sq = jnp.dot(ar_ref[...], ac_ref[...], preferred_element_type=jnp.float32)
    k = sq.shape[0]
    row = jax.lax.broadcasted_iota(jnp.int32, (k, k), 0)
    col = jax.lax.broadcasted_iota(jnp.int32, (k, k), 1)
    a1 = jnp.where(row == col, 0.0, sq + 2.0 * asel_ref[...])
    a_out_ref[...] = a1
    out_ref[...] = _conv_score(a1, x_ref[...], w_ref[...],
                               b_ref[...], p_ref[...])


def _bottleneck_up_kernel(perm1_ref, perm2_ref, perm2c_ref,
                          a0_ref, a1_ref, res0_ref, res1_ref,
                          w2_ref, b2_ref, wu0a_ref, wu0b_ref, bu0_ref,
                          wu1a_ref, wu1b_ref, bu1_ref, o_ref, *, n_classes):
    """Level-2 pooling (from perm2), bottleneck GCN, both up-path unpool+concat
    GCNConvs and the masked log_softmax, all VMEM-resident."""
    a1 = a1_ref[...]                      # (k1, k1)
    res1 = res1_ref[...]                  # (k1, LANES), score in SCORE_COL
    k1 = a1.shape[0]
    k2 = perm2_ref.shape[1]
    n = a0_ref.shape[0]

    # one-hot scatter/gather matrices built in-kernel from the perm vectors
    rows_k1 = jax.lax.broadcasted_iota(jnp.int32, (k1, k2), 0)
    s2 = (rows_k1 == perm2_ref[...]).astype(jnp.float32)           # (k1, k2)
    cols_k1 = jax.lax.broadcasted_iota(jnp.int32, (k2, k1), 1)
    s2t = (cols_k1 == perm2c_ref[...]).astype(jnp.float32)         # (k2, k1)
    rows_n = jax.lax.broadcasted_iota(jnp.int32, (n, k1), 0)
    s1 = (rows_n == perm1_ref[...]).astype(jnp.float32)            # (n,  k1)

    # --- level-2 adjacency: a2 = offdiag((a1^2)[p2,p2] + 2*a1[p2,p2]) ---
    a1c = jnp.dot(a1, s2, preferred_element_type=jnp.float32)      # (k1, k2)
    a1r = jnp.dot(s2t, a1, preferred_element_type=jnp.float32)     # (k2, k1)
    asel = jnp.dot(s2t, a1c, preferred_element_type=jnp.float32)   # (k2, k2)
    sq = jnp.dot(a1r, a1c, preferred_element_type=jnp.float32)     # (k2, k2)
    r2 = jax.lax.broadcasted_iota(jnp.int32, (k2, k2), 0)
    c2 = jax.lax.broadcasted_iota(jnp.int32, (k2, k2), 1)
    a2 = jnp.where(r2 == c2, 0.0, sq + 2.0 * asel)

    # --- level-2 pooled features: x2p = x2[perm2] * score2[perm2] ---
    x2g = jnp.dot(s2t, res1, preferred_element_type=jnp.float32)   # (k2, LANES)
    colf = jax.lax.broadcasted_iota(jnp.int32, x2g.shape, 1)
    score_sel = jnp.sum(jnp.where(colf == SCORE_COL, x2g, 0.0),
                        axis=1, keepdims=True)
    x2p = x2g * score_sel

    # --- bottleneck GCNConv + ReLU ---
    xw2 = jnp.dot(x2p, w2_ref[...], preferred_element_type=jnp.float32)
    x3 = _gcn_aggregate(a2, xw2, b2_ref[...], relu=True)           # (k2, LANES)

    # --- up step 0: unpool to level 1 + concat-GCN (reassociated) ---
    y3 = jnp.dot(x3, wu0b_ref[...], preferred_element_type=jnp.float32)
    xw1 = (jnp.dot(res1, wu0a_ref[...], preferred_element_type=jnp.float32)
           + jnp.dot(s2, y3, preferred_element_type=jnp.float32))
    h1 = _gcn_aggregate(a1, xw1, bu0_ref[...], relu=True)          # (k1, LANES)

    # --- up step 1: unpool to level 0 + concat-GCN (no activation) ---
    y1 = jnp.dot(h1, wu1b_ref[...], preferred_element_type=jnp.float32)
    xw0 = (jnp.dot(res0_ref[...], wu1a_ref[...], preferred_element_type=jnp.float32)
           + jnp.dot(s1, y1, preferred_element_type=jnp.float32))
    h0 = _gcn_aggregate(a0_ref[...], xw0, bu1_ref[...], relu=False)  # (n, LANES)

    # --- log_softmax over the first n_classes (real) columns ---
    colc = jax.lax.broadcasted_iota(jnp.int32, h0.shape, 1)
    valid = colc < n_classes
    neg = jnp.float32(-3.0e38)
    m = jnp.max(jnp.where(valid, h0, neg), axis=1, keepdims=True)
    s = jnp.sum(jnp.where(valid, jnp.exp(h0 - m), 0.0), axis=1, keepdims=True)
    o_ref[...] = h0 - (jnp.log(s) + m)       # padded cols sliced off by caller


# ---------------------------------------------------------------------------
# Pallas wrappers
# ---------------------------------------------------------------------------
def down_level0(a, x, w, b, p_hat):
    n = a.shape[0]
    args = (a, x, w, b, p_hat)
    return pl.pallas_call(
        _down0_kernel,
        out_shape=jax.ShapeDtypeStruct((n, LANES), jnp.float32),
        in_specs=[_full_spec(t.shape) for t in args],
        out_specs=_full_spec((n, LANES)),
    )(*args)


def down_level1(ar, ac, asel, x, w, b, p_hat):
    k1 = ar.shape[0]
    args = (ar, ac, asel, x, w, b, p_hat)
    return pl.pallas_call(
        _down1_kernel,
        out_shape=(jax.ShapeDtypeStruct((k1, LANES), jnp.float32),   # conv+score
                   jax.ShapeDtypeStruct((k1, k1), jnp.float32)),     # a1
        in_specs=[_full_spec(t.shape) for t in args],
        out_specs=(_full_spec((k1, LANES)), _full_spec((k1, k1))),
    )(*args)


def bottleneck_and_up(perm1r, perm2r, perm2c, a0, a1, res0, res1,
                      w2, b2, wu0a, wu0b, bu0, wu1a, wu1b, bu1, *, n_classes):
    n = a0.shape[0]
    args = (perm1r, perm2r, perm2c, a0, a1, res0, res1,
            w2, b2, wu0a, wu0b, bu0, wu1a, wu1b, bu1)
    return pl.pallas_call(
        functools.partial(_bottleneck_up_kernel, n_classes=n_classes),
        out_shape=jax.ShapeDtypeStruct((n, LANES), jnp.float32),
        in_specs=[_full_spec(t.shape) for t in args],
        out_specs=_full_spec((n, LANES)),
    )(*args)


# ---------------------------------------------------------------------------
# GraphUNet forward (top-k / data-dependent gathers in JAX, compute in Pallas)
# ---------------------------------------------------------------------------
def graph_unet_forward(x, a, params, n_classes):
    n = x.shape[0]
    x_pad = jnp.zeros((n, LANES), jnp.float32).at[:, : x.shape[1]].set(x)

    # ---- level 0: fused GCN conv + TopK scoring ----
    x1 = down_level0(a, x_pad, params["w0"], params["b0"], params["p0"])
    score1 = x1[:, SCORE_COL]
    k1 = int(math.ceil(0.5 * n))
    _, perm1 = jax.lax.top_k(score1, k1)                 # index plumbing (JAX)
    x1p = x1[perm1] * score1[perm1][:, None]             # (k1, LANES)
    ar1 = a[perm1, :]                                    # (k1, n)
    ac1 = a[:, perm1]                                    # (n, k1)
    asel1 = ar1[:, perm1]                                # (k1, k1)

    # ---- level 1: restricted augment_adj + GCN conv + TopK scoring ----
    x2, a1 = down_level1(ar1, ac1, asel1, x1p,
                         params["w1"], params["b1"], params["p1"])
    score2 = x2[:, SCORE_COL]
    k2 = int(math.ceil(0.5 * k1))
    _, perm2 = jax.lax.top_k(score2, k2)

    perm1r = perm1.astype(jnp.int32).reshape(1, k1)
    perm2r = perm2.astype(jnp.int32).reshape(1, k2)
    perm2c = perm2.astype(jnp.int32).reshape(k2, 1)

    # ---- bottleneck + up path + log_softmax, fully fused ----
    out_pad = bottleneck_and_up(
        perm1r, perm2r, perm2c, a, a1, x1, x2,
        params["w2"], params["b2"],
        params["wu0a"], params["wu0b"], params["bu0"],
        params["wu1a"], params["wu1b"], params["bu1"],
        n_classes=n_classes)
    return out_pad[:, :n_classes]


# ---------------------------------------------------------------------------
# parameter init + host-side padding / weight-split prep
# ---------------------------------------------------------------------------
def _glorot(key, shape):
    fan_in, fan_out = shape[0], shape[-1]
    scale = math.sqrt(2.0 / (fan_in + fan_out))
    return scale * jax.random.normal(key, shape, dtype=jnp.float32)


def init_raw_params(key, f_in, hidden, n_classes):
    ks = jax.random.split(key, 9)
    return {
        "w0": _glorot(ks[0], (f_in, hidden)),   "b0": jnp.zeros((1, hidden), jnp.float32),
        "p0": _glorot(ks[1], (hidden, 1)),
        "w1": _glorot(ks[2], (hidden, hidden)), "b1": jnp.zeros((1, hidden), jnp.float32),
        "p1": _glorot(ks[3], (hidden, 1)),
        "w2": _glorot(ks[4], (hidden, hidden)), "b2": jnp.zeros((1, hidden), jnp.float32),
        "wu0": _glorot(ks[5], (2 * hidden, hidden)),
        "bu0": jnp.zeros((1, hidden), jnp.float32),
        "wu1": _glorot(ks[6], (2 * hidden, n_classes)),
        "bu1": jnp.zeros((1, n_classes), jnp.float32),
    }


def _pad2(w, rows, cols):
    out = jnp.zeros((rows, cols), jnp.float32)
    return out.at[: w.shape[0], : w.shape[1]].set(w.astype(jnp.float32))


def prepare_params(raw, hidden):
    """Pad feature dims to 128 lanes, pre-normalize p, split concat weights."""
    p = {}
    p["w0"] = _pad2(raw["w0"], LANES, LANES)
    p["b0"] = _pad2(raw["b0"], 1, LANES)
    p["p0"] = _pad2((raw["p0"] / jnp.sqrt(jnp.sum(raw["p0"] ** 2))).T, 1, LANES)
    p["w1"] = _pad2(raw["w1"], LANES, LANES)
    p["b1"] = _pad2(raw["b1"], 1, LANES)
    p["p1"] = _pad2((raw["p1"] / jnp.sqrt(jnp.sum(raw["p1"] ** 2))).T, 1, LANES)
    p["w2"] = _pad2(raw["w2"], LANES, LANES)
    p["b2"] = _pad2(raw["b2"], 1, LANES)
    # concat([res, up]) @ W  ->  res @ W_a + up @ W_b   (split on host)
    p["wu0a"] = _pad2(raw["wu0"][:hidden], LANES, LANES)
    p["wu0b"] = _pad2(raw["wu0"][hidden:], LANES, LANES)
    p["bu0"] = _pad2(raw["bu0"], 1, LANES)
    p["wu1a"] = _pad2(raw["wu1"][:hidden], LANES, LANES)
    p["wu1b"] = _pad2(raw["wu1"][hidden:], LANES, LANES)
    p["bu1"] = _pad2(raw["bu1"], 1, LANES)
    return p


# ---------------------------------------------------------------------------
# example run
# ---------------------------------------------------------------------------
if __name__ == "__main__":
    N, F_IN, HIDDEN, N_CLASSES = 64, 16, 32, 8

    key = jax.random.PRNGKey(0)
    k_adj, k_x, k_params = jax.random.split(key, 3)

    # random undirected graph, no self loops, dense 0/1 adjacency
    probs = jax.random.uniform(k_adj, (N, N))
    upper = jnp.triu((probs < 0.15).astype(jnp.float32), k=1)
    adjacency = upper + upper.T

    x = jax.random.normal(k_x, (N, F_IN), dtype=jnp.float32)
    raw = init_raw_params(k_params, F_IN, HIDDEN, N_CLASSES)
    params = prepare_params(raw, HIDDEN)

    fwd = jax.jit(graph_unet_forward, static_argnums=(3,))
    out = fwd(x, adjacency, params, N_CLASSES)
    out = jax.block_until_ready(out)

    assert out.shape == (N, N_CLASSES)
    assert bool(jnp.all(jnp.isfinite(out)))
    # rows of log_softmax should exponentiate-sum to ~1
    assert bool(jnp.allclose(jnp.sum(jnp.exp(out), axis=1), 1.0, atol=1e-3))

    print("KERNEL_OK")
</pallas_src>

<mosaic_0001>
module attributes {stable_mosaic.version = 11 : i64} {
  func.func @_down0_kernel(%arg0: memref<64x64xf32, #tpu.memory_space<vmem>>, %arg1: memref<64x128xf32, #tpu.memory_space<vmem>>, %arg2: memref<128x128xf32, #tpu.memory_space<vmem>>, %arg3: memref<1x128xf32, #tpu.memory_space<vmem>>, %arg4: memref<1x128xf32, #tpu.memory_space<vmem>>, %arg5: memref<64x128xf32, #tpu.memory_space<vmem>>) attributes {dimension_semantics = [], scalar_prefetch = 0 : i64, scratch_operands = 0 : i64, tpu.core_type = #tpu.core_type<tc>} {
    %c0 = arith.constant 0 : index
    %c0_0 = arith.constant 0 : index
    %0 = vector.load %arg0[%c0, %c0_0] : memref<64x64xf32, #tpu.memory_space<vmem>>, vector<64x64xf32>
    %c0_1 = arith.constant 0 : index
    %c0_2 = arith.constant 0 : index
    %1 = vector.load %arg1[%c0_1, %c0_2] : memref<64x128xf32, #tpu.memory_space<vmem>>, vector<64x128xf32>
    %c0_3 = arith.constant 0 : index
    %c0_4 = arith.constant 0 : index
    %2 = vector.load %arg2[%c0_3, %c0_4] : memref<128x128xf32, #tpu.memory_space<vmem>>, vector<128x128xf32>
    %c0_5 = arith.constant 0 : index
    %c0_6 = arith.constant 0 : index
    %3 = vector.load %arg3[%c0_5, %c0_6] : memref<1x128xf32, #tpu.memory_space<vmem>>, vector<1x128xf32>
    %c0_7 = arith.constant 0 : index
    %c0_8 = arith.constant 0 : index
    %4 = vector.load %arg4[%c0_7, %c0_8] : memref<1x128xf32, #tpu.memory_space<vmem>>, vector<1x128xf32>
    %cst = arith.constant dense<0.000000e+00> : vector<64x128xf32>
    %5 = tpu.matmul %1, %2, %cst {dimension_numbers = #tpu.dot_dimension_numbers<[1], [0], [0], [1], [0, 0, 1, 1], [], []>} : vector<64x128xf32>, vector<128x128xf32>, vector<64x128xf32> -> vector<64x128xf32>
    %cst_9 = arith.constant dense<0.000000e+00> : vector<64xf32>
    %6 = vector.multi_reduction <add>, %0, %cst_9 [1] : vector<64x64xf32> to vector<64xf32>
    %7 = vector.shape_cast %6 : vector<64xf32> to vector<64x1xf32>
    %cst_10 = arith.constant 2.000000e+00 : f32
    %8 = vector.broadcast %cst_10 : f32 to vector<64x1xf32>
    %9 = arith.addf %7, %8 : vector<64x1xf32>
    %10 = math.rsqrt %9 : vector<64x1xf32>
    %11 = vector.broadcast %10 : vector<64x1xf32> to vector<64x128xf32>
    %12 = arith.mulf %11, %5 : vector<64x128xf32>
    %cst_11 = arith.constant dense<0.000000e+00> : vector<64x128xf32>
    %13 = tpu.matmul %0, %12, %cst_11 {dimension_numbers = #tpu.dot_dimension_numbers<[1], [0], [0], [1], [0, 0, 1, 1], [], []>} : vector<64x64xf32>, vector<64x128xf32>, vector<64x128xf32> -> vector<64x128xf32>
    %14 = vector.broadcast %10 : vector<64x1xf32> to vector<64x128xf32>
    %15 = arith.mulf %14, %13 : vector<64x128xf32>
    %cst_12 = arith.constant 2.000000e+00 : f32
    %16 = vector.broadcast %cst_12 : f32 to vector<64x1xf32>
    %17 = arith.mulf %16, %10 : vector<64x1xf32>
    %18 = arith.mulf %17, %10 : vector<64x1xf32>
    %19 = vector.broadcast %18 : vector<64x1xf32> to vector<64x128xf32>
    %20 = arith.mulf %19, %5 : vector<64x128xf32>
    %21 = arith.addf %15, %20 : vector<64x128xf32>
    %22 = vector.broadcast %3 : vector<1x128xf32> to vector<64x128xf32>
    %23 = arith.addf %21, %22 : vector<64x128xf32>
    %cst_13 = arith.constant 0.000000e+00 : f32
    %24 = vector.broadcast %cst_13 : f32 to vector<64x128xf32>
    %25 = arith.maximumf %23, %24 : vector<64x128xf32>
    %26 = vector.broadcast %4 : vector<1x128xf32> to vector<64x128xf32>
    %27 = arith.mulf %25, %26 : vector<64x128xf32>
    %cst_14 = arith.constant dense<0.000000e+00> : vector<64xf32>
    %28 = vector.multi_reduction <add>, %27, %cst_14 [1] : vector<64x128xf32> to vector<64xf32>
    %29 = vector.shape_cast %28 : vector<64xf32> to vector<64x1xf32>
    %30 = math.tanh %29 : vector<64x1xf32>
    %31 = tpu.iota {dimensions = array<i32: 1>} : vector<64x128xi32>
    %c32_i32 = arith.constant 32 : i32
    %32 = vector.broadcast %c32_i32 : i32 to vector<64x128xi32>
    %33 = arith.cmpi eq, %31, %32 : vector<64x128xi32>
    %34 = vector.shape_cast %30 : vector<64x1xf32> to vector<64x1xf32>
    %35 = vector.broadcast %34 : vector<64x1xf32> to vector<64x128xf32>
    %36 = arith.select %33, %35, %25 : vector<64x128xi1>, vector<64x128xf32>
    %c0_15 = arith.constant 0 : index
    %c0_16 = arith.constant 0 : index
    %37 = vector.load %arg5[%c0_15, %c0_16] : memref<64x128xf32, #tpu.memory_space<vmem>>, vector<64x128xf32>
    tpu.vector_store %arg5[%c0_15, %c0_16], %36 {strides = array<i32>} : memref<64x128xf32, #tpu.memory_space<vmem>>, vector<64x128xf32>,
    return
  }
}

module attributes {stable_mosaic.version = 11 : i64} {
  func.func @_down1_kernel(%arg0: memref<32x64xf32, #tpu.memory_space<vmem>>, %arg1: memref<64x32xf32, #tpu.memory_space<vmem>>, %arg2: memref<32x32xf32, #tpu.memory_space<vmem>>, %arg3: memref<32x128xf32, #tpu.memory_space<vmem>>, %arg4: memref<128x128xf32, #tpu.memory_space<vmem>>, %arg5: memref<1x128xf32, #tpu.memory_space<vmem>>, %arg6: memref<1x128xf32, #tpu.memory_space<vmem>>, %arg7: memref<32x128xf32, #tpu.memory_space<vmem>>, %arg8: memref<32x32xf32, #tpu.memory_space<vmem>>) attributes {dimension_semantics = [], scalar_prefetch = 0 : i64, scratch_operands = 0 : i64, tpu.core_type = #tpu.core_type<tc>} {
    %c0 = arith.constant 0 : index
    %c0_0 = arith.constant 0 : index
    %0 = vector.load %arg0[%c0, %c0_0] : memref<32x64xf32, #tpu.memory_space<vmem>>, vector<32x64xf32>
    %c0_1 = arith.constant 0 : index
    %c0_2 = arith.constant 0 : index
    %1 = vector.load %arg1[%c0_1, %c0_2] : memref<64x32xf32, #tpu.memory_space<vmem>>, vector<64x32xf32>
    %cst = arith.constant dense<0.000000e+00> : vector<32x32xf32>
    %2 = tpu.matmul %0, %1, %cst {dimension_numbers = #tpu.dot_dimension_numbers<[1], [0], [0], [1], [0, 0, 1, 1], [], []>} : vector<32x64xf32>, vector<64x32xf32>, vector<32x32xf32> -> vector<32x32xf32>
    %3 = tpu.iota {dimensions = array<i32: 0>} : vector<32x32xi32>
    %4 = tpu.iota {dimensions = array<i32: 1>} : vector<32x32xi32>
    %5 = arith.cmpi eq, %3, %4 : vector<32x32xi32>
    %c0_3 = arith.constant 0 : index
    %c0_4 = arith.constant 0 : index
    %6 = vector.load %arg2[%c0_3, %c0_4] : memref<32x32xf32, #tpu.memory_space<vmem>>, vector<32x32xf32>
    %cst_5 = arith.constant 2.000000e+00 : f32
    %7 = vector.broadcast %cst_5 : f32 to vector<32x32xf32>
    %8 = arith.mulf %7, %6 : vector<32x32xf32>
    %9 = arith.addf %2, %8 : vector<32x32xf32>
    %cst_6 = arith.constant 0.000000e+00 : f32
    %10 = vector.broadcast %cst_6 : f32 to vector<32x32xf32>
    %11 = arith.select %5, %10, %9 : vector<32x32xi1>, vector<32x32xf32>
    %c0_7 = arith.constant 0 : index
    %c0_8 = arith.constant 0 : index
    %12 = vector.load %arg8[%c0_7, %c0_8] : memref<32x32xf32, #tpu.memory_space<vmem>>, vector<32x32xf32>
    tpu.vector_store %arg8[%c0_7, %c0_8], %11 {strides = array<i32>} : memref<32x32xf32, #tpu.memory_space<vmem>>, vector<32x32xf32>,
    %c0_9 = arith.constant 0 : index
    %c0_10 = arith.constant 0 : index
    %13 = vector.load %arg3[%c0_9, %c0_10] : memref<32x128xf32, #tpu.memory_space<vmem>>, vector<32x128xf32>
    %c0_11 = arith.constant 0 : index
    %c0_12 = arith.constant 0 : index
    %14 = vector.load %arg4[%c0_11, %c0_12] : memref<128x128xf32, #tpu.memory_space<vmem>>, vector<128x128xf32>
    %c0_13 = arith.constant 0 : index
    %c0_14 = arith.constant 0 : index
    %15 = vector.load %arg5[%c0_13, %c0_14] : memref<1x128xf32, #tpu.memory_space<vmem>>, vector<1x128xf32>
    %c0_15 = arith.constant 0 : index
    %c0_16 = arith.constant 0 : index
    %16 = vector.load %arg6[%c0_15, %c0_16] : memref<1x128xf32, #tpu.memory_space<vmem>>, vector<1x128xf32>
    %cst_17 = arith.constant dense<0.000000e+00> : vector<32x128xf32>
    %17 = tpu.matmul %13, %14, %cst_17 {dimension_numbers = #tpu.dot_dimension_numbers<[1], [0], [0], [1], [0, 0, 1, 1], [], []>} : vector<32x128xf32>, vector<128x128xf32>, vector<32x128xf32> -> vector<32x128xf32>
    %cst_18 = arith.constant dense<0.000000e+00> : vector<32xf32>
    %18 = vector.multi_reduction <add>, %11, %cst_18 [1] : vector<32x32xf32> to vector<32xf32>
    %19 = vector.shape_cast %18 : vector<32xf32> to vector<32x1xf32>
    %cst_19 = arith.constant 2.000000e+00 : f32
    %20 = vector.broadcast %cst_19 : f32 to vector<32x1xf32>
    %21 = arith.addf %19, %20 : vector<32x1xf32>
    %22 = math.rsqrt %21 : vector<32x1xf32>
    %23 = vector.broadcast %22 : vector<32x1xf32> to vector<32x128xf32>
    %24 = arith.mulf %23, %17 : vector<32x128xf32>
    %cst_20 = arith.constant dense<0.000000e+00> : vector<32x128xf32>
    %25 = tpu.matmul %11, %24, %cst_20 {dimension_numbers = #tpu.dot_dimension_numbers<[1], [0], [0], [1], [0, 0, 1, 1], [], []>} : vector<32x32xf32>, vector<32x128xf32>, vector<32x128xf32> -> vector<32x128xf32>
    %26 = vector.broadcast %22 : vector<32x1xf32> to vector<32x128xf32>
    %27 = arith.mulf %26, %25 : vector<32x128xf32>
    %cst_21 = arith.constant 2.000000e+00 : f32
    %28 = vector.broadcast %cst_21 : f32 to vector<32x1xf32>
    %29 = arith.mulf %28, %22 : vector<32x1xf32>
    %30 = arith.mulf %29, %22 : vector<32x1xf32>
    %31 = vector.broadcast %30 : vector<32x1xf32> to vector<32x128xf32>
    %32 = arith.mulf %31, %17 : vector<32x128xf32>
    %33 = arith.addf %27, %32 : vector<32x128xf32>
    %34 = vector.broadcast %15 : vector<1x128xf32> to vector<32x128xf32>
    %35 = arith.addf %33, %34 : vector<32x128xf32>
    %cst_22 = arith.constant 0.000000e+00 : f32
    %36 = vector.broadcast %cst_22 : f32 to vector<32x128xf32>
    %37 = arith.maximumf %35, %36 : vector<32x128xf32>
    %38 = vector.broadcast %16 : vector<1x128xf32> to vector<32x128xf32>
    %39 = arith.mulf %37, %38 : vector<32x128xf32>
    %cst_23 = arith.constant dense<0.000000e+00> : vector<32xf32>
    %40 = vector.multi_reduction <add>, %39, %cst_23 [1] : vector<32x128xf32> to vector<32xf32>
    %41 = vector.shape_cast %40 : vector<32xf32> to vector<32x1xf32>
    %42 = math.tanh %41 : vector<32x1xf32>
    %43 = tpu.iota {dimensions = array<i32: 1>} : vector<32x128xi32>
    %c32_i32 = arith.constant 32 : i32
    %44 = vector.broadcast %c32_i32 : i32 to vector<32x128xi32>
    %45 = arith.cmpi eq, %43, %44 : vector<32x128xi32>
    %46 = vector.shape_cast %42 : vector<32x1xf32> to vector<32x1xf32>
    %47 = vector.broadcast %46 : vector<32x1xf32> to vector<32x128xf32>
    %48 = arith.select %45, %47, %37 : vector<32x128xi1>, vector<32x128xf32>
    %c0_24 = arith.constant 0 : index
    %c0_25 = arith.constant 0 : index
    %49 = vector.load %arg7[%c0_24, %c0_25] : memref<32x128xf32, #tpu.memory_space<vmem>>, vector<32x128xf32>
    tpu.vector_store %arg7[%c0_24, %c0_25], %48 {strides = array<i32>} : memref<32x128xf32, #tpu.memory_space<vmem>>, vector<32x128xf32>,
    return
  }
}

module attributes {stable_mosaic.version = 11 : i64} {
  func.func @_bottleneck_up_kernel(%arg0: memref<1x32xi32, #tpu.memory_space<vmem>>, %arg1: memref<1x16xi32, #tpu.memory_space<vmem>>, %arg2: memref<16x1xi32, #tpu.memory_space<vmem>>, %arg3: memref<64x64xf32, #tpu.memory_space<vmem>>, %arg4: memref<32x32xf32, #tpu.memory_space<vmem>>, %arg5: memref<64x128xf32, #tpu.memory_space<vmem>>, %arg6: memref<32x128xf32, #tpu.memory_space<vmem>>, %arg7: memref<128x128xf32, #tpu.memory_space<vmem>>, %arg8: memref<1x128xf32, #tpu.memory_space<vmem>>, %arg9: memref<128x128xf32, #tpu.memory_space<vmem>>, %arg10: memref<128x128xf32, #tpu.memory_space<vmem>>, %arg11: memref<1x128xf32, #tpu.memory_space<vmem>>, %arg12: memref<128x128xf32, #tpu.memory_space<vmem>>, %arg13: memref<128x128xf32, #tpu.memory_space<vmem>>, %arg14: memref<1x128xf32, #tpu.memory_space<vmem>>, %arg15: memref<64x128xf32, #tpu.memory_space<vmem>>) attributes {dimension_semantics = [], scalar_prefetch = 0 : i64, scratch_operands = 0 : i64, tpu.core_type = #tpu.core_type<tc>} {
    %c0 = arith.constant 0 : index
    %c0_0 = arith.constant 0 : index
    %0 = vector.load %arg4[%c0, %c0_0] : memref<32x32xf32, #tpu.memory_space<vmem>>, vector<32x32xf32>
    %c0_1 = arith.constant 0 : index
    %c0_2 = arith.constant 0 : index
    %1 = vector.load %arg6[%c0_1, %c0_2] : memref<32x128xf32, #tpu.memory_space<vmem>>, vector<32x128xf32>
    %2 = tpu.iota {dimensions = array<i32: 0>} : vector<32x16xi32>
    %c0_3 = arith.constant 0 : index
    %c0_4 = arith.constant 0 : index
    %3 = vector.load %arg1[%c0_3, %c0_4] : memref<1x16xi32, #tpu.memory_space<vmem>>, vector<1x16xi32>
    %4 = vector.broadcast %3 : vector<1x16xi32> to vector<32x16xi32>
    %5 = arith.cmpi eq, %2, %4 : vector<32x16xi32>
    %6 = arith.extui %5 : vector<32x16xi1> to vector<32x16xi32>
    %7 = arith.sitofp %6 : vector<32x16xi32> to vector<32x16xf32>
    %8 = tpu.iota {dimensions = array<i32: 1>} : vector<16x32xi32>
    %c0_5 = arith.constant 0 : index
    %c0_6 = arith.constant 0 : index
    %9 = vector.load %arg2[%c0_5, %c0_6] : memref<16x1xi32, #tpu.memory_space<vmem>>, vector<16x1xi32>
    %10 = vector.broadcast %9 : vector<16x1xi32> to vector<16x32xi32>
    %11 = arith.cmpi eq, %8, %10 : vector<16x32xi32>
    %12 = arith.extui %11 : vector<16x32xi1> to vector<16x32xi32>
    %13 = arith.sitofp %12 : vector<16x32xi32> to vector<16x32xf32>
    %14 = tpu.iota {dimensions = array<i32: 0>} : vector<64x32xi32>
    %c0_7 = arith.constant 0 : index
    %c0_8 = arith.constant 0 : index
    %15 = vector.load %arg0[%c0_7, %c0_8] : memref<1x32xi32, #tpu.memory_space<vmem>>, vector<1x32xi32>
    %16 = vector.broadcast %15 : vector<1x32xi32> to vector<64x32xi32>
    %17 = arith.cmpi eq, %14, %16 : vector<64x32xi32>
    %18 = arith.extui %17 : vector<64x32xi1> to vector<64x32xi32>
    %19 = arith.sitofp %18 : vector<64x32xi32> to vector<64x32xf32>
    %cst = arith.constant dense<0.000000e+00> : vector<32x16xf32>
    %20 = tpu.matmul %0, %7, %cst {dimension_numbers = #tpu.dot_dimension_numbers<[1], [0], [0], [1], [0, 0, 1, 1], [], []>} : vector<32x32xf32>, vector<32x16xf32>, vector<32x16xf32> -> vector<32x16xf32>
    %cst_9 = arith.constant dense<0.000000e+00> : vector<16x32xf32>
    %21 = tpu.matmul %13, %0, %cst_9 {dimension_numbers = #tpu.dot_dimension_numbers<[1], [0], [0], [1], [0, 0, 1, 1], [], []>} : vector<16x32xf32>, vector<32x32xf32>, vector<16x32xf32> -> vector<16x32xf32>
    %cst_10 = arith.constant dense<0.000000e+00> : vector<16x16xf32>
    %22 = tpu.matmul %13, %20, %cst_10 {dimension_numbers = #tpu.dot_dimension_numbers<[1], [0], [0], [1], [0, 0, 1, 1], [], []>} : vector<16x32xf32>, vector<32x16xf32>, vector<16x16xf32> -> vector<16x16xf32>
    %cst_11 = arith.constant dense<0.000000e+00> : vector<16x16xf32>
    %23 = tpu.matmul %21, %20, %cst_11 {dimension_numbers = #tpu.dot_dimension_numbers<[1], [0], [0], [1], [0, 0, 1, 1], [], []>} : vector<16x32xf32>, vector<32x16xf32>, vector<16x16xf32> -> vector<16x16xf32>
    %24 = tpu.iota {dimensions = array<i32: 0>} : vector<16x16xi32>
    %25 = tpu.iota {dimensions = array<i32: 1>} : vector<16x16xi32>
    %26 = arith.cmpi eq, %24, %25 : vector<16x16xi32>
    %cst_12 = arith.constant 2.000000e+00 : f32
    %27 = vector.broadcast %cst_12 : f32 to vector<16x16xf32>
    %28 = arith.mulf %27, %22 : vector<16x16xf32>
    %29 = arith.addf %23, %28 : vector<16x16xf32>
    %cst_13 = arith.constant 0.000000e+00 : f32
    %30 = vector.broadcast %cst_13 : f32 to vector<16x16xf32>
    %31 = arith.select %26, %30, %29 : vector<16x16xi1>, vector<16x16xf32>
    %cst_14 = arith.constant dense<0.000000e+00> : vector<16x128xf32>
    %32 = tpu.matmul %13, %1, %cst_14 {dimension_numbers = #tpu.dot_dimension_numbers<[1], [0], [0], [1], [0, 0, 1, 1], [], []>} : vector<16x32xf32>, vector<32x128xf32>, vector<16x128xf32> -> vector<16x128xf32>
    %33 = tpu.iota {dimensions = array<i32: 1>} : vector<16x128xi32>
    %c32_i32 = arith.constant 32 : i32
    %34 = vector.broadcast %c32_i32 : i32 to vector<16x128xi32>
    %35 = arith.cmpi eq, %33, %34 : vector<16x128xi32>
    %cst_15 = arith.constant 0.000000e+00 : f32
    %36 = vector.broadcast %cst_15 : f32 to vector<16x128xf32>
    %37 = arith.select %35, %32, %36 : vector<16x128xi1>, vector<16x128xf32>
    %cst_16 = arith.constant dense<0.000000e+00> : vector<16xf32>
    %38 = vector.multi_reduction <add>, %37, %cst_16 [1] : vector<16x128xf32> to vector<16xf32>
    %39 = vector.shape_cast %38 : vector<16xf32> to vector<16x1xf32>
    %40 = vector.broadcast %39 : vector<16x1xf32> to vector<16x128xf32>
    %41 = arith.mulf %32, %40 : vector<16x128xf32>
    %c0_17 = arith.constant 0 : index
    %c0_18 = arith.constant 0 : index
    %42 = vector.load %arg7[%c0_17, %c0_18] : memref<128x128xf32, #tpu.memory_space<vmem>>, vector<128x128xf32>
    %cst_19 = arith.constant dense<0.000000e+00> : vector<16x128xf32>
    %43 = tpu.matmul %41, %42, %cst_19 {dimension_numbers = #tpu.dot_dimension_numbers<[1], [0], [0], [1], [0, 0, 1, 1], [], []>} : vector<16x128xf32>, vector<128x128xf32>, vector<16x128xf32> -> vector<16x128xf32>
    %c0_20 = arith.constant 0 : index
    %c0_21 = arith.constant 0 : index
    %44 = vector.load %arg8[%c0_20, %c0_21] : memref<1x128xf32, #tpu.memory_space<vmem>>, vector<1x128xf32>
    %cst_22 = arith.constant dense<0.000000e+00> : vector<16xf32>
    %45 = vector.multi_reduction <add>, %31, %cst_22 [1] : vector<16x16xf32> to vector<16xf32>
    %46 = vector.shape_cast %45 : vector<16xf32> to vector<16x1xf32>
    %cst_23 = arith.constant 2.000000e+00 : f32
    %47 = vector.broadcast %cst_23 : f32 to vector<16x1xf32>
    %48 = arith.addf %46, %47 : vector<16x1xf32>
    %49 = math.rsqrt %48 : vector<16x1xf32>
    %50 = vector.broadcast %49 : vector<16x1xf32> to vector<16x128xf32>
    %51 = arith.mulf %50, %43 : vector<16x128xf32>
    %cst_24 = arith.constant dense<0.000000e+00> : vector<16x128xf32>
    %52 = tpu.matmul %31, %51, %cst_24 {dimension_numbers = #tpu.dot_dimension_numbers<[1], [0], [0], [1], [0, 0, 1, 1], [], []>} : vector<16x16xf32>, vector<16x128xf32>, vector<16x128xf32> -> vector<16x128xf32>
    %53 = vector.broadcast %49 : vector<16x1xf32> to vector<16x128xf32>
    %54 = arith.mulf %53, %52 : vector<16x128xf32>
    %cst_25 = arith.constant 2.000000e+00 : f32
    %55 = vector.broadcast %cst_25 : f32 to vector<16x1xf32>
    %56 = arith.mulf %55, %49 : vector<16x1xf32>
    %57 = arith.mulf %56, %49 : vector<16x1xf32>
    %58 = vector.broadcast %57 : vector<16x1xf32> to vector<16x128xf32>
    %59 = arith.mulf %58, %43 : vector<16x128xf32>
    %60 = arith.addf %54, %59 : vector<16x128xf32>
    %61 = vector.broadcast %44 : vector<1x128xf32> to vector<16x128xf32>
    %62 = arith.addf %60, %61 : vector<16x128xf32>
    %cst_26 = arith.constant 0.000000e+00 : f32
    %63 = vector.broadcast %cst_26 : f32 to vector<16x128xf32>
    %64 = arith.maximumf %62, %63 : vector<16x128xf32>
    %c0_27 = arith.constant 0 : index
    %c0_28 = arith.constant 0 : index
    %65 = vector.load %arg10[%c0_27, %c0_28] : memref<128x128xf32, #tpu.memory_space<vmem>>, vector<128x128xf32>
    %cst_29 = arith.constant dense<0.000000e+00> : vector<16x128xf32>
    %66 = tpu.matmul %64, %65, %cst_29 {dimension_numbers = #tpu.dot_dimension_numbers<[1], [0], [0], [1], [0, 0, 1, 1], [], []>} : vector<16x128xf32>, vector<128x128xf32>, vector<16x128xf32> -> vector<16x128xf32>
    %c0_30 = arith.constant 0 : index
    %c0_31 = arith.constant 0 : index
    %67 = vector.load %arg9[%c0_30, %c0_31] : memref<128x128xf32, #tpu.memory_space<vmem>>, vector<128x128xf32>
    %cst_32 = arith.constant dense<0.000000e+00> : vector<32x128xf32>
    %68 = tpu.matmul %1, %67, %cst_32 {dimension_numbers = #tpu.dot_dimension_numbers<[1], [0], [0], [1], [0, 0, 1, 1], [], []>} : vector<32x128xf32>, vector<128x128xf32>, vector<32x128xf32> -> vector<32x128xf32>
    %cst_33 = arith.constant dense<0.000000e+00> : vector<32x128xf32>
    %69 = tpu.matmul %7, %66, %cst_33 {dimension_numbers = #tpu.dot_dimension_numbers<[1], [0], [0], [1], [0, 0, 1, 1], [], []>} : vector<32x16xf32>, vector<16x128xf32>, vector<32x128xf32> -> vector<32x128xf32>
    %70 = arith.addf %68, %69 : vector<32x128xf32>
    %c0_34 = arith.constant 0 : index
    %c0_35 = arith.constant 0 : index
    %71 = vector.load %arg11[%c0_34, %c0_35] : memref<1x128xf32, #tpu.memory_space<vmem>>, vector<1x128xf32>
    %cst_36 = arith.constant dense<0.000000e+00> : vector<32xf32>
    %72 = vector.multi_reduction <add>, %0, %cst_36 [1] : vector<32x32xf32> to vector<32xf32>
    %73 = vector.shape_cast %72 : vector<32xf32> to vector<32x1xf32>
    %cst_37 = arith.constant 2.000000e+00 : f32
    %74 = vector.broadcast %cst_37 : f32 to vector<32x1xf32>
    %75 = arith.addf %73, %74 : vector<32x1xf32>
    %76 = math.rsqrt %75 : vector<32x1xf32>
    %77 = vector.broadcast %76 : vector<32x1xf32> to vector<32x128xf32>
    %78 = arith.mulf %77, %70 : vector<32x128xf32>
    %cst_38 = arith.constant dense<0.000000e+00> : vector<32x128xf32>
    %79 = tpu.matmul %0, %78, %cst_38 {dimension_numbers = #tpu.dot_dimension_numbers<[1], [0], [0], [1], [0, 0, 1, 1], [], []>} : vector<32x32xf32>, vector<32x128xf32>, vector<32x128xf32> -> vector<32x128xf32>
    %80 = vector.broadcast %76 : vector<32x1xf32> to vector<32x128xf32>
    %81 = arith.mulf %80, %79 : vector<32x128xf32>
    %cst_39 = arith.constant 2.000000e+00 : f32
    %82 = vector.broadcast %cst_39 : f32 to vector<32x1xf32>
    %83 = arith.mulf %82, %76 : vector<32x1xf32>
    %84 = arith.mulf %83, %76 : vector<32x1xf32>
    %85 = vector.broadcast %84 : vector<32x1xf32> to vector<32x128xf32>
    %86 = arith.mulf %85, %70 : vector<32x128xf32>
    %87 = arith.addf %81, %86 : vector<32x128xf32>
    %88 = vector.broadcast %71 : vector<1x128xf32> to vector<32x128xf32>
    %89 = arith.addf %87, %88 : vector<32x128xf32>
    %cst_40 = arith.constant 0.000000e+00 : f32
    %90 = vector.broadcast %cst_40 : f32 to vector<32x128xf32>
    %91 = arith.maximumf %89, %90 : vector<32x128xf32>
    %c0_41 = arith.constant 0 : index
    %c0_42 = arith.constant 0 : index
    %92 = vector.load %arg13[%c0_41, %c0_42] : memref<128x128xf32, #tpu.memory_space<vmem>>, vector<128x128xf32>
    %cst_43 = arith.constant dense<0.000000e+00> : vector<32x128xf32>
    %93 = tpu.matmul %91, %92, %cst_43 {dimension_numbers = #tpu.dot_dimension_numbers<[1], [0], [0], [1], [0, 0, 1, 1], [], []>} : vector<32x128xf32>, vector<128x128xf32>, vector<32x128xf32> -> vector<32x128xf32>
    %c0_44 = arith.constant 0 : index
    %c0_45 = arith.constant 0 : index
    %94 = vector.load %arg5[%c0_44, %c0_45] : memref<64x128xf32, #tpu.memory_space<vmem>>, vector<64x128xf32>
    %c0_46 = arith.constant 0 : index
    %c0_47 = arith.constant 0 : index
    %95 = vector.load %arg12[%c0_46, %c0_47] : memref<128x128xf32, #tpu.memory_space<vmem>>, vector<128x128xf32>
    %cst_48 = arith.constant dense<0.000000e+00> : vector<64x128xf32>
    %96 = tpu.matmul %94, %95, %cst_48 {dimension_numbers = #tpu.dot_dimension_numbers<[1], [0], [0], [1], [0, 0, 1, 1], [], []>} : vector<64x128xf32>, vector<128x128xf32>, vector<64x128xf32> -> vector<64x128xf32>
    %cst_49 = arith.constant dense<0.000000e+00> : vector<64x128xf32>
    %97 = tpu.matmul %19, %93, %cst_49 {dimension_numbers = #tpu.dot_dimension_numbers<[1], [0], [0], [1], [0, 0, 1, 1], [], []>} : vector<64x32xf32>, vector<32x128xf32>, vector<64x128xf32> -> vector<64x128xf32>
    %98 = arith.addf %96, %97 : vector<64x128xf32>
    %c0_50 = arith.constant 0 : index
    %c0_51 = arith.constant 0 : index
    %99 = vector.load %arg3[%c0_50, %c0_51] : memref<64x64xf32, #tpu.memory_space<vmem>>, vector<64x64xf32>
    %c0_52 = arith.constant 0 : index
    %c0_53 = arith.constant 0 : index
    %100 = vector.load %arg14[%c0_52, %c0_53] : memref<1x128xf32, #tpu.memory_space<vmem>>, vector<1x128xf32>
    %cst_54 = arith.constant dense<0.000000e+00> : vector<64xf32>
    %101 = vector.multi_reduction <add>, %99, %cst_54 [1] : vector<64x64xf32> to vector<64xf32>
    %102 = vector.shape_cast %101 : vector<64xf32> to vector<64x1xf32>
    %cst_55 = arith.constant 2.000000e+00 : f32
    %103 = vector.broadcast %cst_55 : f32 to vector<64x1xf32>
    %104 = arith.addf %102, %103 : vector<64x1xf32>
    %105 = math.rsqrt %104 : vector<64x1xf32>
    %106 = vector.broadcast %105 : vector<64x1xf32> to vector<64x128xf32>
    %107 = arith.mulf %106, %98 : vector<64x128xf32>
    %cst_56 = arith.constant dense<0.000000e+00> : vector<64x128xf32>
    %108 = tpu.matmul %99, %107, %cst_56 {dimension_numbers = #tpu.dot_dimension_numbers<[1], [0], [0], [1], [0, 0, 1, 1], [], []>} : vector<64x64xf32>, vector<64x128xf32>, vector<64x128xf32> -> vector<64x128xf32>
    %109 = vector.broadcast %105 : vector<64x1xf32> to vector<64x128xf32>
    %110 = arith.mulf %109, %108 : vector<64x128xf32>
    %cst_57 = arith.constant 2.000000e+00 : f32
    %111 = vector.broadcast %cst_57 : f32 to vector<64x1xf32>
    %112 = arith.mulf %111, %105 : vector<64x1xf32>
    %113 = arith.mulf %112, %105 : vector<64x1xf32>
    %114 = vector.broadcast %113 : vector<64x1xf32> to vector<64x128xf32>
    %115 = arith.mulf %114, %98 : vector<64x128xf32>
    %116 = arith.addf %110, %115 : vector<64x128xf32>
    %117 = vector.broadcast %100 : vector<1x128xf32> to vector<64x128xf32>
    %118 = arith.addf %116, %117 : vector<64x128xf32>
    %119 = tpu.iota {dimensions = array<i32: 1>} : vector<64x128xi32>
    %c8_i32 = arith.constant 8 : i32
    %120 = vector.broadcast %c8_i32 : i32 to vector<64x128xi32>
    %121 = arith.cmpi slt, %119, %120 : vector<64x128xi32>
    %cst_58 = arith.constant -3.000000e+38 : f32
    %122 = vector.broadcast %cst_58 : f32 to vector<64x128xf32>
    %123 = arith.select %121, %118, %122 : vector<64x128xi1>, vector<64x128xf32>
    %cst_59 = arith.constant dense<0xFF800000> : vector<64xf32>
    %124 = vector.multi_reduction <maximumf>, %123, %cst_59 [1] : vector<64x128xf32> to vector<64xf32>
    %125 = vector.shape_cast %124 : vector<64xf32> to vector<64x1xf32>
    %126 = vector.broadcast %125 : vector<64x1xf32> to vector<64x128xf32>
    %127 = arith.subf %118, %126 : vector<64x128xf32>
    %128 = math.exp %127 : vector<64x128xf32>
    %cst_60 = arith.constant 0.000000e+00 : f32
    %129 = vector.broadcast %cst_60 : f32 to vector<64x128xf32>
    %130 = arith.select %121, %128, %129 : vector<64x128xi1>, vector<64x128xf32>
    %cst_61 = arith.constant dense<0.000000e+00> : vector<64xf32>
    %131 = vector.multi_reduction <add>, %130, %cst_61 [1] : vector<64x128xf32> to vector<64xf32>
    %132 = vector.shape_cast %131 : vector<64xf32> to vector<64x1xf32>
    %133 = math.log %132 : vector<64x1xf32>
    %134 = arith.addf %133, %125 : vector<64x1xf32>
    %135 = vector.broadcast %134 : vector<64x1xf32> to vector<64x128xf32>
    %136 = arith.subf %118, %135 : vector<64x128xf32>
    %c0_62 = arith.constant 0 : index
    %c0_63 = arith.constant 0 : index
    %137 = vector.load %arg15[%c0_62, %c0_63] : memref<64x128xf32, #tpu.memory_space<vmem>>, vector<64x128xf32>
    tpu.vector_store %arg15[%c0_62, %c0_63], %136 {strides = array<i32>} : memref<64x128xf32, #tpu.memory_space<vmem>>, vector<64x128xf32>,
    return
  }
}

</mosaic_0001>

<llo_original>
// kernel: graph_unet_forward.3
$region0: #{graph_unet_forward.3}
  #allocation0 [shape = 'u32[]', space=smem, size = 0x4, offset = 0x4, fixed_abs, tag = 'smem constant byte address 0x4 - core index']
  #allocation1 [shape = 'u32[72,128]{1,0:T(1,128)}', space=vmem, size = 0x9000, scoped, tag = 'internal scratch']
  %s0 = inlined_call_operand.vmem [shape: f32[64,64], index: 0, kind: input, shape index: {}]
  %s1 = inlined_call_operand.vmem [shape: f32[64,128], index: 1, kind: input, shape index: {}]
  %s2 = inlined_call_operand.vmem [shape: f32[128,128], index: 2, kind: input, shape index: {}]
  %s3 = inlined_call_operand.vmem [shape: f32[1,128], index: 3, kind: input, shape index: {}]
  %s4 = inlined_call_operand.vmem [shape: f32[1,128], index: 4, kind: input, shape index: {}]
  %s5 = inlined_call_operand.vmem [shape: f32[64,128], index: 5, kind: output, shape index: {}]
  %s6 = sld [smem:[#allocation0]]
  $region30: #{graph_unet_forward.3} parent=0
    _
  %s8 = ssub.s32 1, %s6
  %s9 = scalar_select 0, %s8, %s6
  // Predicated region
  $region2: #{graph_unet_forward.3} parent=0 // pred_check
    _
  $region3: #{graph_unet_forward.3} parent=0 // pred_check_branch
    %11 = sbr.rel (0) target = $region5
  $region4: #{graph_unet_forward.3} parent=0 // pred_region
    _
  $region5: #{graph_unet_forward.3} parent=0 // pred_fallthru
    _
  // Predicated region
  $region6: #{graph_unet_forward.3} parent=0 // pred_check
    _
  $region7: #{graph_unet_forward.3} parent=0 // pred_check_branch
    %13 = sbr.rel (0) target = $region9
  $region8: #{graph_unet_forward.3} parent=0 // pred_region
    _
  $region9: #{graph_unet_forward.3} parent=0 // pred_fallthru
    _
  // Predicated region
  $region10: #{graph_unet_forward.3} parent=0 // pred_check
    _
  $region11: #{graph_unet_forward.3} parent=0 // pred_check_branch
    %15 = sbr.rel (0) target = $region13
  $region12: #{graph_unet_forward.3} parent=0 // pred_region
    _
  $region13: #{graph_unet_forward.3} parent=0 // pred_fallthru
    _
  // Predicated region
  $region14: #{graph_unet_forward.3} parent=0 // pred_check
    _
  $region15: #{graph_unet_forward.3} parent=0 // pred_check_branch
    %17 = sbr.rel (0) target = $region17
  $region16: #{graph_unet_forward.3} parent=0 // pred_region
    _
  $region17: #{graph_unet_forward.3} parent=0 // pred_fallthru
    _
  // Predicated region
  $region18: #{graph_unet_forward.3} parent=0 // pred_check
    _
  $region19: #{graph_unet_forward.3} parent=0 // pred_check_branch
    %19 = sbr.rel (0) target = $region21
  $region20: #{graph_unet_forward.3} parent=0 // pred_region
    _
  $region21: #{graph_unet_forward.3} parent=0 // pred_fallthru
    _
  %v20 = vld [vmem:[%s0] sm:$0xff]
  %v21 = vld [vmem:[%s0 + $0x8] sm:$0xff]
  %v22 = vld [vmem:[%s0 + $0x10] sm:$0xff]
  %v23 = vld [vmem:[%s0 + $0x18] sm:$0xff]
  %v24 = vld [vmem:[%s0 + $0x20] sm:$0xff]
  %v25 = vld [vmem:[%s0 + $0x28] sm:$0xff]
  %v26 = vld [vmem:[%s0 + $0x30] sm:$0xff]
  %v27 = vld [vmem:[%s0 + $0x38] sm:$0xff]
  %v28 = vld [vmem:[%s1] sm:$0xff]
  %v29 = vld [vmem:[%s1 + $0x8] sm:$0xff]
  %v30 = vld [vmem:[%s1 + $0x10] sm:$0xff]
  %v31 = vld [vmem:[%s1 + $0x18] sm:$0xff]
  %v32 = vld [vmem:[%s1 + $0x20] sm:$0xff]
  %v33 = vld [vmem:[%s1 + $0x28] sm:$0xff]
  %v34 = vld [vmem:[%s1 + $0x30] sm:$0xff]
  %v35 = vld [vmem:[%s1 + $0x38] sm:$0xff]
  %v36 = vld [vmem:[%s2] sm:$0xff]
  %v37 = vld [vmem:[%s2 + $0x8] sm:$0xff]
  %v38 = vld [vmem:[%s2 + $0x10] sm:$0xff]
  %v39 = vld [vmem:[%s2 + $0x18] sm:$0xff]
  %v40 = vld [vmem:[%s2 + $0x20] sm:$0xff]
  %v41 = vld [vmem:[%s2 + $0x28] sm:$0xff]
  %v42 = vld [vmem:[%s2 + $0x30] sm:$0xff]
  %v43 = vld [vmem:[%s2 + $0x38] sm:$0xff]
  %v44 = vld [vmem:[%s2 + $0x40] sm:$0xff]
  %v45 = vld [vmem:[%s2 + $0x48] sm:$0xff]
  %v46 = vld [vmem:[%s2 + $0x50] sm:$0xff]
  %v47 = vld [vmem:[%s2 + $0x58] sm:$0xff]
  %v48 = vld [vmem:[%s2 + $0x60] sm:$0xff]
  %v49 = vld [vmem:[%s2 + $0x68] sm:$0xff]
  %v50 = vld [vmem:[%s2 + $0x70] sm:$0xff]
  %v51 = vld [vmem:[%s2 + $0x78] sm:$0xff]
  %v52 = vld [vmem:[%s3] sm:$0x1]
  %v53 = vld [vmem:[%s4] sm:$0x1]
  %54 = vmatpush.msra.mxu0 %v51
  %55 = vmatpush.msra.mxu0 %v50
  %56 = vmatpush.msra.mxu0 %v49
  %57 = vmatpush.msra.mxu0 %v48
  %58 = vmatpush.msra.mxu0 %v47
  %59 = vmatpush.msra.mxu0 %v46
  %60 = vmatpush.msra.mxu0 %v45
  %61 = vmatpush.msra.mxu0 %v44
  %62 = vmatpush.msra.mxu0 %v43
  %63 = vmatpush.msra.mxu0 %v42
  %64 = vmatpush.msra.mxu0 %v41
  %65 = vmatpush.msra.mxu0 %v40
  %66 = vmatpush.msra.mxu0 %v39
  %67 = vmatpush.msra.mxu0 %v38
  %68 = vmatpush.msra.mxu0 %v37
  %69 = vmatpush.msra.mxu0 %v36
  %70 = vmatmul.f32.gmra.mxu0 %v28
  %v71 = vpop.f32.mrf.mxu0
  %v72 = vadd.f32 0.0, %v71
  %73 = vmatmul.f32.gmra.mxu0 %v29
  %v74 = vpop.f32.mrf.mxu0
  %v75 = vadd.f32 0.0, %v74
  %76 = vmatmul.f32.gmra.mxu0 %v30
  %v77 = vpop.f32.mrf.mxu0
  %v78 = vadd.f32 0.0, %v77
  %79 = vmatmul.f32.gmra.mxu0 %v31
  %v80 = vpop.f32.mrf.mxu0
  %v81 = vadd.f32 0.0, %v80
  %82 = vmatmul.f32.gmra.mxu0 %v32
  %v83 = vpop.f32.mrf.mxu0
  %v84 = vadd.f32 0.0, %v83
  %85 = vmatmul.f32.gmra.mxu0 %v33
  %v86 = vpop.f32.mrf.mxu0
  %v87 = vadd.f32 0.0, %v86
  %88 = vmatmul.f32.gmra.mxu0 %v34
  %v89 = vpop.f32.mrf.mxu0
  %v90 = vadd.f32 0.0, %v89
  %91 = vmatmul.f32.gmra.mxu0 %v35
  %v92 = vpop.f32.mrf.mxu0
  %v93 = vadd.f32 0.0, %v92
  %94 = vdwg.mxu0
  %vm95 = vcmask 523264
  %v96 = vsel %vm95, %v20, 0.0
  %97 = vadd.xlane.f32.xlu0 %v96
  %v98 = vpop.xlane.xlu0 %97
  %v99 = vsel %vm95, %v21, 0.0
  %100 = vadd.xlane.f32.xlu0 %v99
  %v101 = vpop.xlane.xlu0 %100
  %v102 = vsel %vm95, %v22, 0.0
  %103 = vadd.xlane.f32.xlu0 %v102
  %v104 = vpop.xlane.xlu0 %103
  %v105 = vsel %vm95, %v23, 0.0
  %106 = vadd.xlane.f32.xlu0 %v105
  %v107 = vpop.xlane.xlu0 %106
  %v108 = vsel %vm95, %v24, 0.0
  %109 = vadd.xlane.f32.xlu0 %v108
  %v110 = vpop.xlane.xlu0 %109
  %v111 = vsel %vm95, %v25, 0.0
  %112 = vadd.xlane.f32.xlu0 %v111
  %v113 = vpop.xlane.xlu0 %112
  %v114 = vsel %vm95, %v26, 0.0
  %115 = vadd.xlane.f32.xlu0 %v114
  %v116 = vpop.xlane.xlu0 %115
  %v117 = vsel %vm95, %v27, 0.0
  %118 = vadd.xlane.f32.xlu0 %v117
  %v119 = vpop.xlane.xlu0 %118
  %v120 = vadd.f32 %v98, 2.0
  %v121 = vadd.f32 %v101, 2.0
  %v122 = vadd.f32 %v104, 2.0
  %v123 = vadd.f32 %v107, 2.0
  %v124 = vadd.f32 %v110, 2.0
  %v125 = vadd.f32 %v113, 2.0
  %v126 = vadd.f32 %v116, 2.0
  %v127 = vadd.f32 %v119, 2.0
  %v128 = vrsqrt.pop %v120
  %v129 = vmul.f32 %v128, %v120
  %v130 = vmul.f32 %v129, %v128
  %v131 = vmul.f32 0.5, %v130
  %v132 = vsub.f32 1.5, %v131
  %v133 = vmul.f32 %v128, %v132
  %vm134 = vweird.f32 %v120
  %vm135 = vweird.f32 %v128
  %vm136 = vmor %vm134, %vm135
  %v137 = vsel %vm136, %v128, %v133
  %v138 = vrsqrt.pop %v121
  %v139 = vmul.f32 %v138, %v121
  %v140 = vmul.f32 %v139, %v138
  %v141 = vmul.f32 0.5, %v140
  %v142 = vsub.f32 1.5, %v141
  %v143 = vmul.f32 %v138, %v142
  %vm144 = vweird.f32 %v121
  %vm145 = vweird.f32 %v138
  %vm146 = vmor %vm144, %vm145
  %v147 = vsel %vm146, %v138, %v143
  %v148 = vrsqrt.pop %v122
  %v149 = vmul.f32 %v148, %v122
  %v150 = vmul.f32 %v149, %v148
  %v151 = vmul.f32 0.5, %v150
  %v152 = vsub.f32 1.5, %v151
  %v153 = vmul.f32 %v148, %v152
  %vm154 = vweird.f32 %v122
  %vm155 = vweird.f32 %v148
  %vm156 = vmor %vm154, %vm155
  %v157 = vsel %vm156, %v148, %v153
  %v158 = vrsqrt.pop %v123
  %v159 = vmul.f32 %v158, %v123
  %v160 = vmul.f32 %v159, %v158
  %v161 = vmul.f32 0.5, %v160
  %v162 = vsub.f32 1.5, %v161
  %v163 = vmul.f32 %v158, %v162
  %vm164 = vweird.f32 %v123
  %vm165 = vweird.f32 %v158
  %vm166 = vmor %vm164, %vm165
  %v167 = vsel %vm166, %v158, %v163
  %v168 = vrsqrt.pop %v124
  %v169 = vmul.f32 %v168, %v124
  %v170 = vmul.f32 %v169, %v168
  %v171 = vmul.f32 0.5, %v170
  %v172 = vsub.f32 1.5, %v171
  %v173 = vmul.f32 %v168, %v172
  %vm174 = vweird.f32 %v124
  %vm175 = vweird.f32 %v168
  %vm176 = vmor %vm174, %vm175
  %v177 = vsel %vm176, %v168, %v173
  %v178 = vrsqrt.pop %v125
  %v179 = vmul.f32 %v178, %v125
  %v180 = vmul.f32 %v179, %v178
  %v181 = vmul.f32 0.5, %v180
  %v182 = vsub.f32 1.5, %v181
  %v183 = vmul.f32 %v178, %v182
  %vm184 = vweird.f32 %v125
  %vm185 = vweird.f32 %v178
  %vm186 = vmor %vm184, %vm185
  %v187 = vsel %vm186, %v178, %v183
  %v188 = vrsqrt.pop %v126
  %v189 = vmul.f32 %v188, %v126
  %v190 = vmul.f32 %v189, %v188
  %v191 = vmul.f32 0.5, %v190
  %v192 = vsub.f32 1.5, %v191
  %v193 = vmul.f32 %v188, %v192
  %vm194 = vweird.f32 %v126
  %vm195 = vweird.f32 %v188
  %vm196 = vmor %vm194, %vm195
  %v197 = vsel %vm196, %v188, %v193
  %v198 = vrsqrt.pop %v127
  %v199 = vmul.f32 %v198, %v127
  %v200 = vmul.f32 %v199, %v198
  %v201 = vmul.f32 0.5, %v200
  %v202 = vsub.f32 1.5, %v201
  %v203 = vmul.f32 %v198, %v202
  %vm204 = vweird.f32 %v127
  %vm205 = vweird.f32 %v198
  %vm206 = vmor %vm204, %vm205
  %v207 = vsel %vm206, %v198, %v203
  %v208 = vmul.f32 %v137, %v72
  %v209 = vmul.f32 %v147, %v75
  %v210 = vmul.f32 %v157, %v78
  %v211 = vmul.f32 %v167, %v81
  %v212 = vmul.f32 %v177, %v84
  %v213 = vmul.f32 %v187, %v87
  %v214 = vmul.f32 %v197, %v90
  %v215 = vmul.f32 %v207, %v93
  %v217 = vsel %vm95, %v20, 0
  %v220 = vsel %vm95, %v21, 0
  %v223 = vsel %vm95, %v22, 0
  %v226 = vsel %vm95, %v23, 0
  %v229 = vsel %vm95, %v24, 0
  %v232 = vsel %vm95, %v25, 0
  %v235 = vsel %vm95, %v26, 0
  %v238 = vsel %vm95, %v27, 0
  %240 = vmatpush.msra.mxu0 0.0
  %241 = vmatpush.msra.mxu0 0.0
  %242 = vmatpush.msra.mxu0 0.0
  %243 = vmatpush.msra.mxu0 0.0
  %244 = vmatpush.msra.mxu0 0.0
  %245 = vmatpush.msra.mxu0 0.0
  %246 = vmatpush.msra.mxu0 0.0
  %247 = vmatpush.msra.mxu0 0.0
  %248 = vmatpush.msra.mxu0 %v215
  %249 = vmatpush.msra.mxu0 %v214
  %250 = vmatpush.msra.mxu0 %v213
  %251 = vmatpush.msra.mxu0 %v212
  %252 = vmatpush.msra.mxu0 %v211
  %253 = vmatpush.msra.mxu0 %v210
  %254 = vmatpush.msra.mxu0 %v209
  %255 = vmatpush.msra.mxu0 %v208
  %256 = vmatmul.f32.gmra.mxu0 %v217
  %v257 = vpop.f32.mrf.mxu0
  %v258 = vadd.f32 0.0, %v257
  %259 = vmatmul.f32.gmra.mxu0 %v220
  %v260 = vpop.f32.mrf.mxu0
  %v261 = vadd.f32 0.0, %v260
  %262 = vmatmul.f32.gmra.mxu0 %v223
  %v263 = vpop.f32.mrf.mxu0
  %v264 = vadd.f32 0.0, %v263
  %265 = vmatmul.f32.gmra.mxu0 %v226
  %v266 = vpop.f32.mrf.mxu0
  %v267 = vadd.f32 0.0, %v266
  %268 = vmatmul.f32.gmra.mxu0 %v229
  %v269 = vpop.f32.mrf.mxu0
  %v270 = vadd.f32 0.0, %v269
  %271 = vmatmul.f32.gmra.mxu0 %v232
  %v272 = vpop.f32.mrf.mxu0
  %v273 = vadd.f32 0.0, %v272
  %274 = vmatmul.f32.gmra.mxu0 %v235
  %v275 = vpop.f32.mrf.mxu0
  %v276 = vadd.f32 0.0, %v275
  %277 = vmatmul.f32.gmra.mxu0 %v238
  %v278 = vpop.f32.mrf.mxu0
  %v279 = vadd.f32 0.0, %v278
  %280 = vdwg.mxu0
  %v281 = vmul.f32 %v137, %v258
  %v282 = vmul.f32 %v147, %v261
  %v283 = vmul.f32 %v157, %v264
  %v284 = vmul.f32 %v167, %v267
  %v285 = vmul.f32 %v177, %v270
  %v286 = vmul.f32 %v187, %v273
  %v287 = vmul.f32 %v197, %v276
  %v288 = vmul.f32 %v207, %v279
  %v289 = vmul.f32 %v137, 2.0
  %v290 = vmul.f32 %v147, 2.0
  %v291 = vmul.f32 %v157, 2.0
  %v292 = vmul.f32 %v167, 2.0
  %v293 = vmul.f32 %v177, 2.0
  %v294 = vmul.f32 %v187, 2.0
  %v295 = vmul.f32 %v197, 2.0
  %v296 = vmul.f32 %v207, 2.0
  %v297 = vmul.f32 %v289, %v137
  %v298 = vmul.f32 %v290, %v147
  %v299 = vmul.f32 %v291, %v157
  %v300 = vmul.f32 %v292, %v167
  %v301 = vmul.f32 %v293, %v177
  %v302 = vmul.f32 %v294, %v187
  %v303 = vmul.f32 %v295, %v197
  %v304 = vmul.f32 %v296, %v207
  %v305 = vmul.f32 %v297, %v72
  %v306 = vmul.f32 %v298, %v75
  %v307 = vmul.f32 %v299, %v78
  %v308 = vmul.f32 %v300, %v81
  %v309 = vmul.f32 %v301, %v84
  %v310 = vmul.f32 %v302, %v87
  %v311 = vmul.f32 %v303, %v90
  %v312 = vmul.f32 %v304, %v93
  %v313 = vadd.f32 %v281, %v305
  %v314 = vadd.f32 %v282, %v306
  %v315 = vadd.f32 %v283, %v307
  %v316 = vadd.f32 %v284, %v308
  %v317 = vadd.f32 %v285, %v309
  %v318 = vadd.f32 %v286, %v310
  %v319 = vadd.f32 %v287, %v311
  %v320 = vadd.f32 %v288, %v312
  %v322 = vperm.slane %v52, 0
  %v324 = vadd.f32 %v313, %v322
  %v325 = vadd.f32 %v314, %v322
  %v326 = vadd.f32 %v315, %v322
  %v327 = vadd.f32 %v316, %v322
  %v328 = vadd.f32 %v317, %v322
  %v329 = vadd.f32 %v318, %v322
  %v330 = vadd.f32 %v319, %v322
  %v331 = vadd.f32 %v320, %v322
  %v332 = vmax.f32 %v324, 0.0
  %v333 = vmax.f32 %v325, 0.0
  %v334 = vmax.f32 %v326, 0.0
  %v335 = vmax.f32 %v327, 0.0
  %v336 = vmax.f32 %v328, 0.0
  %v337 = vmax.f32 %v329, 0.0
  %v338 = vmax.f32 %v330, 0.0
  %v339 = vmax.f32 %v331, 0.0
  %v341 = vperm.slane %v53, 0
  %v343 = vmul.f32 %v332, %v341
  %v344 = vmul.f32 %v333, %v341
  %v345 = vmul.f32 %v334, %v341
  %v346 = vmul.f32 %v335, %v341
  %v347 = vmul.f32 %v336, %v341
  %v348 = vmul.f32 %v337, %v341
  %v349 = vmul.f32 %v338, %v341
  %v350 = vmul.f32 %v339, %v341
  %351 = vadd.xlane.f32.xlu0 %v343
  %v352 = vpop.xlane.xlu0 %351
  %353 = vadd.xlane.f32.xlu0 %v344
  %v354 = vpop.xlane.xlu0 %353
  %355 = vadd.xlane.f32.xlu0 %v345
  %v356 = vpop.xlane.xlu0 %355
  %357 = vadd.xlane.f32.xlu0 %v346
  %v358 = vpop.xlane.xlu0 %357
  %359 = vadd.xlane.f32.xlu0 %v347
  %v360 = vpop.xlane.xlu0 %359
  %361 = vadd.xlane.f32.xlu0 %v348
  %v362 = vpop.xlane.xlu0 %361
  %363 = vadd.xlane.f32.xlu0 %v349
  %v364 = vpop.xlane.xlu0 %363
  %365 = vadd.xlane.f32.xlu0 %v350
  %v366 = vpop.xlane.xlu0 %365
  %v367 = vtanh.pop %v352
  %v368 = vtanh.pop %v354
  %v369 = vtanh.pop %v356
  %v370 = vtanh.pop %v358
  %v371 = vtanh.pop %v360
  %v372 = vtanh.pop %v362
  %v373 = vtanh.pop %v364
  %v374 = vtanh.pop %v366
  %v375 = vlaneseq
  %v376 = vand.u32 %v375, 127
  %vm377 = vcmp.eq.s32.totalorder %v376, 32
  %v378 = vsel %vm377, %v367, %v332
  %v379 = vsel %vm377, %v368, %v333
  %v380 = vsel %vm377, %v369, %v334
  %v381 = vsel %vm377, %v370, %v335
  %v382 = vsel %vm377, %v371, %v336
  %v383 = vsel %vm377, %v372, %v337
  %v384 = vsel %vm377, %v373, %v338
  %v385 = vsel %vm377, %v374, %v339
  %386 = vst [vmem:[%s5] sm:$0xff] %v378
  %387 = vst [vmem:[%s5 + $0x8] sm:$0xff] %v379
  %388 = vst [vmem:[%s5 + $0x10] sm:$0xff] %v380
  %389 = vst [vmem:[%s5 + $0x18] sm:$0xff] %v381
  %390 = vst [vmem:[%s5 + $0x20] sm:$0xff] %v382
  %391 = vst [vmem:[%s5 + $0x28] sm:$0xff] %v383
  %392 = vst [vmem:[%s5 + $0x30] sm:$0xff] %v384
  %393 = vst [vmem:[%s5 + $0x38] sm:$0xff] %v385
  // Predicated region
  $region22: #{graph_unet_forward.3} parent=0 // pred_check
    _
  $region23: #{graph_unet_forward.3} parent=0 // pred_check_branch
    %395 = sbr.rel (0) target = $region25
  $region24: #{graph_unet_forward.3} parent=0 // pred_region
    _
  $region25: #{graph_unet_forward.3} parent=0 // pred_fallthru
    _
  // Predicated region
  $region26: #{graph_unet_forward.3} parent=0 // pred_check
    _
  $region27: #{graph_unet_forward.3} parent=0 // pred_check_branch
    %397 = sbr.rel (0) target = $region29
  $region28: #{graph_unet_forward.3} parent=0 // pred_region
    _
  $region29: #{graph_unet_forward.3} parent=0 // pred_fallthru
    _

// kernel: graph_unet_forward.4
$region0: #{graph_unet_forward.4}
  #allocation0 [shape = 'u32[]', space=smem, size = 0x4, offset = 0x4, fixed_abs, tag = 'smem constant byte address 0x4 - core index']
  #allocation1 [shape = 'u32[72,128]{1,0:T(1,128)}', space=vmem, size = 0x9000, scoped, tag = 'internal scratch']
  %s0 = inlined_call_operand.vmem [shape: f32[32,64], index: 0, kind: input, shape index: {}]
  %s1 = inlined_call_operand.vmem [shape: f32[64,32], index: 1, kind: input, shape index: {}]
  %s2 = inlined_call_operand.vmem [shape: f32[32,32], index: 2, kind: input, shape index: {}]
  %s3 = inlined_call_operand.vmem [shape: f32[32,128], index: 3, kind: input, shape index: {}]
  %s4 = inlined_call_operand.vmem [shape: f32[128,128], index: 4, kind: input, shape index: {}]
  %s5 = inlined_call_operand.vmem [shape: f32[1,128], index: 5, kind: input, shape index: {}]
  %s6 = inlined_call_operand.vmem [shape: f32[1,128], index: 6, kind: input, shape index: {}]
  %s7 = inlined_call_operand.vmem [shape: f32[32,128], index: 7, kind: output, shape index: {0}]
  %s8 = inlined_call_operand.vmem [shape: f32[32,32], index: 8, kind: output, shape index: {1}]
  %9 = xla_tuple %s7, %s8
  %s10 = sld [smem:[#allocation0]]
  $region46: #{graph_unet_forward.4} parent=0
    _
  %s12 = ssub.s32 1, %s10
  %s13 = scalar_select 0, %s12, %s10
  // Predicated region
  $region2: #{graph_unet_forward.4} parent=0 // pred_check
    _
  $region3: #{graph_unet_forward.4} parent=0 // pred_check_branch
    %15 = sbr.rel (0) target = $region5
  $region4: #{graph_unet_forward.4} parent=0 // pred_region
    _
  $region5: #{graph_unet_forward.4} parent=0 // pred_fallthru
    _
  // Predicated region
  $region6: #{graph_unet_forward.4} parent=0 // pred_check
    _
  $region7: #{graph_unet_forward.4} parent=0 // pred_check_branch
    %17 = sbr.rel (0) target = $region9
  $region8: #{graph_unet_forward.4} parent=0 // pred_region
    _
  $region9: #{graph_unet_forward.4} parent=0 // pred_fallthru
    _
  // Predicated region
  $region10: #{graph_unet_forward.4} parent=0 // pred_check
    _
  $region11: #{graph_unet_forward.4} parent=0 // pred_check_branch
    %19 = sbr.rel (0) target = $region13
  $region12: #{graph_unet_forward.4} parent=0 // pred_region
    _
  $region13: #{graph_unet_forward.4} parent=0 // pred_fallthru
    _
  // Predicated region
  $region14: #{graph_unet_forward.4} parent=0 // pred_check
    _
  $region15: #{graph_unet_forward.4} parent=0 // pred_check_branch
    %21 = sbr.rel (0) target = $region17
  $region16: #{graph_unet_forward.4} parent=0 // pred_region
    _
  $region17: #{graph_unet_forward.4} parent=0 // pred_fallthru
    _
  // Predicated region
  $region18: #{graph_unet_forward.4} parent=0 // pred_check
    _
  $region19: #{graph_unet_forward.4} parent=0 // pred_check_branch
    %23 = sbr.rel (0) target = $region21
  $region20: #{graph_unet_forward.4} parent=0 // pred_region
    _
  $region21: #{graph_unet_forward.4} parent=0 // pred_fallthru
    _
  // Predicated region
  $region22: #{graph_unet_forward.4} parent=0 // pred_check
    _
  $region23: #{graph_unet_forward.4} parent=0 // pred_check_branch
    %25 = sbr.rel (0) target = $region25
  $region24: #{graph_unet_forward.4} parent=0 // pred_region
    _
  $region25: #{graph_unet_forward.4} parent=0 // pred_fallthru
    _
  // Predicated region
  $region26: #{graph_unet_forward.4} parent=0 // pred_check
    _
  $region27: #{graph_unet_forward.4} parent=0 // pred_check_branch
    %27 = sbr.rel (0) target = $region29
  $region28: #{graph_unet_forward.4} parent=0 // pred_region
    _
  $region29: #{graph_unet_forward.4} parent=0 // pred_fallthru
    _
  %v28 = vld [vmem:[%s0] sm:$0xff]
  %v29 = vld [vmem:[%s0 + $0x8] sm:$0xff]
  %v30 = vld [vmem:[%s0 + $0x10] sm:$0xff]
  %v31 = vld [vmem:[%s0 + $0x18] sm:$0xff]
  %v32 = vld [vmem:[%s1] sm:$0xff]
  %v33 = vld [vmem:[%s1 + $0x8] sm:$0xff]
  %v34 = vld [vmem:[%s1 + $0x10] sm:$0xff]
  %v35 = vld [vmem:[%s1 + $0x18] sm:$0xff]
  %v36 = vld [vmem:[%s1 + $0x20] sm:$0xff]
  %v37 = vld [vmem:[%s1 + $0x28] sm:$0xff]
  %v38 = vld [vmem:[%s1 + $0x30] sm:$0xff]
  %v39 = vld [vmem:[%s1 + $0x38] sm:$0xff]
  %v40 = vlaneseq
  %v41 = vshrl.u32 %v40, 7
  %v42 = vadd.s32 %v41, 8
  %v43 = vadd.s32 %v41, 16
  %v44 = vadd.s32 %v41, 24
  %v45 = vlaneseq
  %v46 = vand.u32 %v45, 127
  %vm47 = vcmp.eq.s32.totalorder %v41, %v46
  %vm48 = vcmp.eq.s32.totalorder %v42, %v46
  %vm49 = vcmp.eq.s32.totalorder %v43, %v46
  %vm50 = vcmp.eq.s32.totalorder %v44, %v46
  %v51 = vld [vmem:[%s2] sm:$0xff]
  %v52 = vld [vmem:[%s2 + $0x8] sm:$0xff]
  %v53 = vld [vmem:[%s2 + $0x10] sm:$0xff]
  %v54 = vld [vmem:[%s2 + $0x18] sm:$0xff]
  %v55 = vmul.f32 %v51, 2.0
  %v56 = vmul.f32 %v52, 2.0
  %v57 = vmul.f32 %v53, 2.0
  %v58 = vmul.f32 %v54, 2.0
  %vm59 = vcmask 523264
  %v61 = vsel %vm59, %v28, 0
  %v64 = vsel %vm59, %v29, 0
  %v67 = vsel %vm59, %v30, 0
  %v70 = vsel %vm59, %v31, 0
  %72 = vmatpush.msra.mxu0 0.0
  %73 = vmatpush.msra.mxu0 0.0
  %74 = vmatpush.msra.mxu0 0.0
  %75 = vmatpush.msra.mxu0 0.0
  %76 = vmatpush.msra.mxu0 0.0
  %77 = vmatpush.msra.mxu0 0.0
  %78 = vmatpush.msra.mxu0 0.0
  %79 = vmatpush.msra.mxu0 0.0
  %80 = vmatpush.msra.mxu0 %v39
  %81 = vmatpush.msra.mxu0 %v38
  %82 = vmatpush.msra.mxu0 %v37
  %83 = vmatpush.msra.mxu0 %v36
  %84 = vmatpush.msra.mxu0 %v35
  %85 = vmatpush.msra.mxu0 %v34
  %86 = vmatpush.msra.mxu0 %v33
  %87 = vmatpush.msra.mxu0 %v32
  %88 = vmatmul.f32.gmra.mxu0 %v61
  %v89 = vpop.f32.mrf.mxu0
  %v90 = vadd.f32 %v55, %v89
  %91 = vmatmul.f32.gmra.mxu0 %v64
  %v92 = vpop.f32.mrf.mxu0
  %v93 = vadd.f32 %v56, %v92
  %94 = vmatmul.f32.gmra.mxu0 %v67
  %v95 = vpop.f32.mrf.mxu0
  %v96 = vadd.f32 %v57, %v95
  %97 = vmatmul.f32.gmra.mxu0 %v70
  %v98 = vpop.f32.mrf.mxu0
  %v99 = vadd.f32 %v58, %v98
  %100 = vdwg.mxu0
  %v101 = vsel %vm47, 0.0, %v90
  %v102 = vsel %vm48, 0.0, %v93
  %v103 = vsel %vm49, 0.0, %v96
  %v104 = vsel %vm50, 0.0, %v99
  %vm105 = vcmask 261120
  %106 = vst.msk [vmem:[%s8] sm:$0xff] %vm105, %v101
  %107 = vst.msk [vmem:[%s8 + $0x8] sm:$0xff] %vm105, %v102
  %108 = vst.msk [vmem:[%s8 + $0x10] sm:$0xff] %vm105, %v103
  %109 = vst.msk [vmem:[%s8 + $0x18] sm:$0xff] %vm105, %v104
  %v110 = vld [vmem:[%s3] sm:$0xff]
  %v111 = vld [vmem:[%s3 + $0x8] sm:$0xff]
  %v112 = vld [vmem:[%s3 + $0x10] sm:$0xff]
  %v113 = vld [vmem:[%s3 + $0x18] sm:$0xff]
  %v114 = vld [vmem:[%s4] sm:$0xff]
  %v115 = vld [vmem:[%s4 + $0x8] sm:$0xff]
  %v116 = vld [vmem:[%s4 + $0x10] sm:$0xff]
  %v117 = vld [vmem:[%s4 + $0x18] sm:$0xff]
  %v118 = vld [vmem:[%s4 + $0x20] sm:$0xff]
  %v119 = vld [vmem:[%s4 + $0x28] sm:$0xff]
  %v120 = vld [vmem:[%s4 + $0x30] sm:$0xff]
  %v121 = vld [vmem:[%s4 + $0x38] sm:$0xff]
  %v122 = vld [vmem:[%s4 + $0x40] sm:$0xff]
  %v123 = vld [vmem:[%s4 + $0x48] sm:$0xff]
  %v124 = vld [vmem:[%s4 + $0x50] sm:$0xff]
  %v125 = vld [vmem:[%s4 + $0x58] sm:$0xff]
  %v126 = vld [vmem:[%s4 + $0x60] sm:$0xff]
  %v127 = vld [vmem:[%s4 + $0x68] sm:$0xff]
  %v128 = vld [vmem:[%s4 + $0x70] sm:$0xff]
  %v129 = vld [vmem:[%s4 + $0x78] sm:$0xff]
  %v130 = vld [vmem:[%s5] sm:$0x1]
  %v131 = vld [vmem:[%s6] sm:$0x1]
  %132 = vmatpush.msra.mxu0 %v129
  %133 = vmatpush.msra.mxu0 %v128
  %134 = vmatpush.msra.mxu0 %v127
  %135 = vmatpush.msra.mxu0 %v126
  %136 = vmatpush.msra.mxu0 %v125
  %137 = vmatpush.msra.mxu0 %v124
  %138 = vmatpush.msra.mxu0 %v123
  %139 = vmatpush.msra.mxu0 %v122
  %140 = vmatpush.msra.mxu0 %v121
  %141 = vmatpush.msra.mxu0 %v120
  %142 = vmatpush.msra.mxu0 %v119
  %143 = vmatpush.msra.mxu0 %v118
  %144 = vmatpush.msra.mxu0 %v117
  %145 = vmatpush.msra.mxu0 %v116
  %146 = vmatpush.msra.mxu0 %v115
  %147 = vmatpush.msra.mxu0 %v114
  %148 = vmatmul.f32.gmra.mxu0 %v110
  %v149 = vpop.f32.mrf.mxu0
  %v150 = vadd.f32 0.0, %v149
  %151 = vmatmul.f32.gmra.mxu0 %v111
  %v152 = vpop.f32.mrf.mxu0
  %v153 = vadd.f32 0.0, %v152
  %154 = vmatmul.f32.gmra.mxu0 %v112
  %v155 = vpop.f32.mrf.mxu0
  %v156 = vadd.f32 0.0, %v155
  %157 = vmatmul.f32.gmra.mxu0 %v113
  %v158 = vpop.f32.mrf.mxu0
  %v159 = vadd.f32 0.0, %v158
  %160 = vdwg.mxu0
  %v161 = vsel %vm105, %v101, 0.0
  %162 = vadd.xlane.f32.xlu0 %v161
  %v163 = vpop.xlane.xlu0 %162
  %v164 = vsel %vm105, %v102, 0.0
  %165 = vadd.xlane.f32.xlu0 %v164
  %v166 = vpop.xlane.xlu0 %165
  %v167 = vsel %vm105, %v103, 0.0
  %168 = vadd.xlane.f32.xlu0 %v167
  %v169 = vpop.xlane.xlu0 %168
  %v170 = vsel %vm105, %v104, 0.0
  %171 = vadd.xlane.f32.xlu0 %v170
  %v172 = vpop.xlane.xlu0 %171
  %v173 = vadd.f32 %v163, 2.0
  %v174 = vadd.f32 %v166, 2.0
  %v175 = vadd.f32 %v169, 2.0
  %v176 = vadd.f32 %v172, 2.0
  %v177 = vrsqrt.pop %v173
  %v178 = vmul.f32 %v177, %v173
  %v179 = vmul.f32 %v178, %v177
  %v180 = vmul.f32 0.5, %v179
  %v181 = vsub.f32 1.5, %v180
  %v182 = vmul.f32 %v177, %v181
  %vm183 = vweird.f32 %v173
  %vm184 = vweird.f32 %v177
  %vm185 = vmor %vm183, %vm184
  %v186 = vsel %vm185, %v177, %v182
  %v187 = vrsqrt.pop %v174
  %v188 = vmul.f32 %v187, %v174
  %v189 = vmul.f32 %v188, %v187
  %v190 = vmul.f32 0.5, %v189
  %v191 = vsub.f32 1.5, %v190
  %v192 = vmul.f32 %v187, %v191
  %vm193 = vweird.f32 %v174
  %vm194 = vweird.f32 %v187
  %vm195 = vmor %vm193, %vm194
  %v196 = vsel %vm195, %v187, %v192
  %v197 = vrsqrt.pop %v175
  %v198 = vmul.f32 %v197, %v175
  %v199 = vmul.f32 %v198, %v197
  %v200 = vmul.f32 0.5, %v199
  %v201 = vsub.f32 1.5, %v200
  %v202 = vmul.f32 %v197, %v201
  %vm203 = vweird.f32 %v175
  %vm204 = vweird.f32 %v197
  %vm205 = vmor %vm203, %vm204
  %v206 = vsel %vm205, %v197, %v202
  %v207 = vrsqrt.pop %v176
  %v208 = vmul.f32 %v207, %v176
  %v209 = vmul.f32 %v208, %v207
  %v210 = vmul.f32 0.5, %v209
  %v211 = vsub.f32 1.5, %v210
  %v212 = vmul.f32 %v207, %v211
  %vm213 = vweird.f32 %v176
  %vm214 = vweird.f32 %v207
  %vm215 = vmor %vm213, %vm214
  %v216 = vsel %vm215, %v207, %v212
  %v217 = vmul.f32 %v186, %v150
  %v218 = vmul.f32 %v196, %v153
  %v219 = vmul.f32 %v206, %v156
  %v220 = vmul.f32 %v216, %v159
  %v222 = vsel %vm105, %v101, 0
  %v225 = vsel %vm105, %v102, 0
  %v228 = vsel %vm105, %v103, 0
  %v231 = vsel %vm105, %v104, 0
  %233 = vmatpush.msra.mxu0 0.0
  %234 = vmatpush.msra.mxu0 0.0
  %235 = vmatpush.msra.mxu0 0.0
  %236 = vmatpush.msra.mxu0 0.0
  %237 = vmatpush.msra.mxu0 0.0
  %238 = vmatpush.msra.mxu0 0.0
  %239 = vmatpush.msra.mxu0 0.0
  %240 = vmatpush.msra.mxu0 0.0
  %241 = vmatpush.msra.mxu0 0.0
  %242 = vmatpush.msra.mxu0 0.0
  %243 = vmatpush.msra.mxu0 0.0
  %244 = vmatpush.msra.mxu0 0.0
  %245 = vmatpush.msra.mxu0 %v220
  %246 = vmatpush.msra.mxu0 %v219
  %247 = vmatpush.msra.mxu0 %v218
  %248 = vmatpush.msra.mxu0 %v217
  %249 = vmatmul.f32.gmra.mxu0 %v222
  %v250 = vpop.f32.mrf.mxu0
  %v251 = vadd.f32 0.0, %v250
  %252 = vmatmul.f32.gmra.mxu0 %v225
  %v253 = vpop.f32.mrf.mxu0
  %v254 = vadd.f32 0.0, %v253
  %255 = vmatmul.f32.gmra.mxu0 %v228
  %v256 = vpop.f32.mrf.mxu0
  %v257 = vadd.f32 0.0, %v256
  %258 = vmatmul.f32.gmra.mxu0 %v231
  %v259 = vpop.f32.mrf.mxu0
  %v260 = vadd.f32 0.0, %v259
  %261 = vdwg.mxu0
  %v262 = vmul.f32 %v186, %v251
  %v263 = vmul.f32 %v196, %v254
  %v264 = vmul.f32 %v206, %v257
  %v265 = vmul.f32 %v216, %v260
  %v266 = vmul.f32 %v186, 2.0
  %v267 = vmul.f32 %v196, 2.0
  %v268 = vmul.f32 %v206, 2.0
  %v269 = vmul.f32 %v216, 2.0
  %v270 = vmul.f32 %v266, %v186
  %v271 = vmul.f32 %v267, %v196
  %v272 = vmul.f32 %v268, %v206
  %v273 = vmul.f32 %v269, %v216
  %v274 = vmul.f32 %v270, %v150
  %v275 = vmul.f32 %v271, %v153
  %v276 = vmul.f32 %v272, %v156
  %v277 = vmul.f32 %v273, %v159
  %v278 = vadd.f32 %v262, %v274
  %v279 = vadd.f32 %v263, %v275
  %v280 = vadd.f32 %v264, %v276
  %v281 = vadd.f32 %v265, %v277
  %v283 = vperm.slane %v130, 0
  %v285 = vadd.f32 %v278, %v283
  %v286 = vadd.f32 %v279, %v283
  %v287 = vadd.f32 %v280, %v283
  %v288 = vadd.f32 %v281, %v283
  %v289 = vmax.f32 %v285, 0.0
  %v290 = vmax.f32 %v286, 0.0
  %v291 = vmax.f32 %v287, 0.0
  %v292 = vmax.f32 %v288, 0.0
  %v294 = vperm.slane %v131, 0
  %v296 = vmul.f32 %v289, %v294
  %v297 = vmul.f32 %v290, %v294
  %v298 = vmul.f32 %v291, %v294
  %v299 = vmul.f32 %v292, %v294
  %300 = vadd.xlane.f32.xlu0 %v296
  %v301 = vpop.xlane.xlu0 %300
  %302 = vadd.xlane.f32.xlu0 %v297
  %v303 = vpop.xlane.xlu0 %302
  %304 = vadd.xlane.f32.xlu0 %v298
  %v305 = vpop.xlane.xlu0 %304
  %306 = vadd.xlane.f32.xlu0 %v299
  %v307 = vpop.xlane.xlu0 %306
  %v308 = vtanh.pop %v301
  %v309 = vtanh.pop %v303
  %v310 = vtanh.pop %v305
  %v311 = vtanh.pop %v307
  %vm312 = vcmp.eq.s32.totalorder %v46, 32
  %v313 = vsel %vm312, %v308, %v289
  %v314 = vsel %vm312, %v309, %v290
  %v315 = vsel %vm312, %v310, %v291
  %v316 = vsel %vm312, %v311, %v292
  %317 = vst [vmem:[%s7] sm:$0xff] %v313
  %318 = vst [vmem:[%s7 + $0x8] sm:$0xff] %v314
  %319 = vst [vmem:[%s7 + $0x10] sm:$0xff] %v315
  %320 = vst [vmem:[%s7 + $0x18] sm:$0xff] %v316
  // Predicated region
  $region30: #{graph_unet_forward.4} parent=0 // pred_check
    _
  $region31: #{graph_unet_forward.4} parent=0 // pred_check_branch
    %322 = sbr.rel (0) target = $region33
  $region32: #{graph_unet_forward.4} parent=0 // pred_region
    _
  $region33: #{graph_unet_forward.4} parent=0 // pred_fallthru
    _
  // Predicated region
  $region34: #{graph_unet_forward.4} parent=0 // pred_check
    _
  $region35: #{graph_unet_forward.4} parent=0 // pred_check_branch
    %324 = sbr.rel (0) target = $region37
  $region36: #{graph_unet_forward.4} parent=0 // pred_region
    _
  $region37: #{graph_unet_forward.4} parent=0 // pred_fallthru
    _
  // Predicated region
  $region38: #{graph_unet_forward.4} parent=0 // pred_check
    _
  $region39: #{graph_unet_forward.4} parent=0 // pred_check_branch
    %326 = sbr.rel (0) target = $region41
  $region40: #{graph_unet_forward.4} parent=0 // pred_region
    _
  $region41: #{graph_unet_forward.4} parent=0 // pred_fallthru
    _
  // Predicated region
  $region42: #{graph_unet_forward.4} parent=0 // pred_check
    _
  $region43: #{graph_unet_forward.4} parent=0 // pred_check_branch
    %328 = sbr.rel (0) target = $region45
  $region44: #{graph_unet_forward.4} parent=0 // pred_region
    _
  $region45: #{graph_unet_forward.4} parent=0 // pred_fallthru
    _

// kernel: graph_unet_forward.5
$region0: #{graph_unet_forward.5}
  #allocation0 [shape = 'u32[]', space=smem, size = 0x4, offset = 0x4, fixed_abs, tag = 'smem constant byte address 0x4 - core index']
  #allocation1 [shape = 'u32[72,128]{1,0:T(1,128)}', space=vmem, size = 0x9000, scoped, tag = 'internal scratch']
  %s0 = inlined_call_operand.vmem [shape: s32[1,32], index: 0, kind: input, shape index: {}]
  %s1 = inlined_call_operand.vmem [shape: s32[1,16], index: 1, kind: input, shape index: {}]
  %s2 = inlined_call_operand.vmem [shape: s32[16,1], index: 2, kind: input, shape index: {}]
  %s3 = inlined_call_operand.vmem [shape: f32[64,64], index: 3, kind: input, shape index: {}]
  %s4 = inlined_call_operand.vmem [shape: f32[32,32], index: 4, kind: input, shape index: {}]
  %s5 = inlined_call_operand.vmem [shape: f32[64,128], index: 5, kind: input, shape index: {}]
  %s6 = inlined_call_operand.vmem [shape: f32[32,128], index: 6, kind: input, shape index: {}]
  %s7 = inlined_call_operand.vmem [shape: f32[128,128], index: 7, kind: input, shape index: {}]
  %s8 = inlined_call_operand.vmem [shape: f32[1,128], index: 8, kind: input, shape index: {}]
  %s9 = inlined_call_operand.vmem [shape: f32[128,128], index: 9, kind: input, shape index: {}]
  %s10 = inlined_call_operand.vmem [shape: f32[128,128], index: 10, kind: input, shape index: {}]
  %s11 = inlined_call_operand.vmem [shape: f32[1,128], index: 11, kind: input, shape index: {}]
  %s12 = inlined_call_operand.vmem [shape: f32[128,128], index: 12, kind: input, shape index: {}]
  %s13 = inlined_call_operand.vmem [shape: f32[128,128], index: 13, kind: input, shape index: {}]
  %s14 = inlined_call_operand.vmem [shape: f32[1,128], index: 14, kind: input, shape index: {}]
  %s15 = inlined_call_operand.vmem [shape: f32[64,128], index: 15, kind: output, shape index: {}]
  %s16 = sld [smem:[#allocation0]]
  $region70: #{graph_unet_forward.5} parent=0
    _
  %s18 = ssub.s32 1, %s16
  %s19 = scalar_select 0, %s18, %s16
  // Predicated region
  $region2: #{graph_unet_forward.5} parent=0 // pred_check
    _
  $region3: #{graph_unet_forward.5} parent=0 // pred_check_branch
    %21 = sbr.rel (0) target = $region5
  $region4: #{graph_unet_forward.5} parent=0 // pred_region
    _
  $region5: #{graph_unet_forward.5} parent=0 // pred_fallthru
    _
  // Predicated region
  $region6: #{graph_unet_forward.5} parent=0 // pred_check
    _
  $region7: #{graph_unet_forward.5} parent=0 // pred_check_branch
    %23 = sbr.rel (0) target = $region9
  $region8: #{graph_unet_forward.5} parent=0 // pred_region
    _
  $region9: #{graph_unet_forward.5} parent=0 // pred_fallthru
    _
  // Predicated region
  $region10: #{graph_unet_forward.5} parent=0 // pred_check
    _
  $region11: #{graph_unet_forward.5} parent=0 // pred_check_branch
    %25 = sbr.rel (0) target = $region13
  $region12: #{graph_unet_forward.5} parent=0 // pred_region
    _
  $region13: #{graph_unet_forward.5} parent=0 // pred_fallthru
    _
  // Predicated region
  $region14: #{graph_unet_forward.5} parent=0 // pred_check
    _
  $region15: #{graph_unet_forward.5} parent=0 // pred_check_branch
    %27 = sbr.rel (0) target = $region17
  $region16: #{graph_unet_forward.5} parent=0 // pred_region
    _
  $region17: #{graph_unet_forward.5} parent=0 // pred_fallthru
    _
  // Predicated region
  $region18: #{graph_unet_forward.5} parent=0 // pred_check
    _
  $region19: #{graph_unet_forward.5} parent=0 // pred_check_branch
    %29 = sbr.rel (0) target = $region21
  $region20: #{graph_unet_forward.5} parent=0 // pred_region
    _
  $region21: #{graph_unet_forward.5} parent=0 // pred_fallthru
    _
  // Predicated region
  $region22: #{graph_unet_forward.5} parent=0 // pred_check
    _
  $region23: #{graph_unet_forward.5} parent=0 // pred_check_branch
    %31 = sbr.rel (0) target = $region25
  $region24: #{graph_unet_forward.5} parent=0 // pred_region
    _
  $region25: #{graph_unet_forward.5} parent=0 // pred_fallthru
    _
  // Predicated region
  $region26: #{graph_unet_forward.5} parent=0 // pred_check
    _
  $region27: #{graph_unet_forward.5} parent=0 // pred_check_branch
    %33 = sbr.rel (0) target = $region29
  $region28: #{graph_unet_forward.5} parent=0 // pred_region
    _
  $region29: #{graph_unet_forward.5} parent=0 // pred_fallthru
    _
  // Predicated region
  $region30: #{graph_unet_forward.5} parent=0 // pred_check
    _
  $region31: #{graph_unet_forward.5} parent=0 // pred_check_branch
    %35 = sbr.rel (0) target = $region33
  $region32: #{graph_unet_forward.5} parent=0 // pred_region
    _
  $region33: #{graph_unet_forward.5} parent=0 // pred_fallthru
    _
  // Predicated region
  $region34: #{graph_unet_forward.5} parent=0 // pred_check
    _
  $region35: #{graph_unet_forward.5} parent=0 // pred_check_branch
    %37 = sbr.rel (0) target = $region37
  $region36: #{graph_unet_forward.5} parent=0 // pred_region
    _
  $region37: #{graph_unet_forward.5} parent=0 // pred_fallthru
    _
  // Predicated region
  $region38: #{graph_unet_forward.5} parent=0 // pred_check
    _
  $region39: #{graph_unet_forward.5} parent=0 // pred_check_branch
    %39 = sbr.rel (0) target = $region41
  $region40: #{graph_unet_forward.5} parent=0 // pred_region
    _
  $region41: #{graph_unet_forward.5} parent=0 // pred_fallthru
    _
  // Predicated region
  $region42: #{graph_unet_forward.5} parent=0 // pred_check
    _
  $region43: #{graph_unet_forward.5} parent=0 // pred_check_branch
    %41 = sbr.rel (0) target = $region45
  $region44: #{graph_unet_forward.5} parent=0 // pred_region
    _
  $region45: #{graph_unet_forward.5} parent=0 // pred_fallthru
    _
  // Predicated region
  $region46: #{graph_unet_forward.5} parent=0 // pred_check
    _
  $region47: #{graph_unet_forward.5} parent=0 // pred_check_branch
    %43 = sbr.rel (0) target = $region49
  $region48: #{graph_unet_forward.5} parent=0 // pred_region
    _
  $region49: #{graph_unet_forward.5} parent=0 // pred_fallthru
    _
  // Predicated region
  $region50: #{graph_unet_forward.5} parent=0 // pred_check
    _
  $region51: #{graph_unet_forward.5} parent=0 // pred_check_branch
    %45 = sbr.rel (0) target = $region53
  $region52: #{graph_unet_forward.5} parent=0 // pred_region
    _
  $region53: #{graph_unet_forward.5} parent=0 // pred_fallthru
    _
  // Predicated region
  $region54: #{graph_unet_forward.5} parent=0 // pred_check
    _
  $region55: #{graph_unet_forward.5} parent=0 // pred_check_branch
    %47 = sbr.rel (0) target = $region57
  $region56: #{graph_unet_forward.5} parent=0 // pred_region
    _
  $region57: #{graph_unet_forward.5} parent=0 // pred_fallthru
    _
  // Predicated region
  $region58: #{graph_unet_forward.5} parent=0 // pred_check
    _
  $region59: #{graph_unet_forward.5} parent=0 // pred_check_branch
    %49 = sbr.rel (0) target = $region61
  $region60: #{graph_unet_forward.5} parent=0 // pred_region
    _
  $region61: #{graph_unet_forward.5} parent=0 // pred_fallthru
    _
  %v50 = vld [vmem:[%s4] sm:$0xff]
  %v51 = vld [vmem:[%s4 + $0x8] sm:$0xff]
  %v52 = vld [vmem:[%s4 + $0x10] sm:$0xff]
  %v53 = vld [vmem:[%s4 + $0x18] sm:$0xff]
  %v54 = vld [vmem:[%s6] sm:$0xff]
  %v55 = vld [vmem:[%s6 + $0x8] sm:$0xff]
  %v56 = vld [vmem:[%s6 + $0x10] sm:$0xff]
  %v57 = vld [vmem:[%s6 + $0x18] sm:$0xff]
  %v58 = vlaneseq
  %v59 = vshrl.u32 %v58, 7
  %v60 = vadd.s32 %v59, 8
  %v61 = vadd.s32 %v59, 16
  %v62 = vadd.s32 %v59, 24
  %v63 = vld [vmem:[%s1] sm:$0x1]
  %v64 = vperm.slane %v63, 0
  %vm65 = vcmp.eq.s32.totalorder %v59, %v64
  %vm66 = vcmp.eq.s32.totalorder %v60, %v64
  %vm67 = vcmp.eq.s32.totalorder %v61, %v64
  %vm68 = vcmp.eq.s32.totalorder %v62, %v64
  %v69 = vsel %vm65, 1, 0
  %v70 = vsel %vm66, 1, 0
  %v71 = vsel %vm67, 1, 0
  %v72 = vsel %vm68, 1, 0
  %v73 = vcvt.s32.f32 %v69
  %v74 = vcvt.s32.f32 %v70
  %v75 = vcvt.s32.f32 %v71
  %v76 = vcvt.s32.f32 %v72
  %v77 = vlaneseq
  %v78 = vand.u32 %v77, 127
  %v79 = vld [vmem:[%s2] sm:$0xff]
  %v80 = vld [vmem:[%s2 + $0x8] sm:$0xff]
  %81 = vset.pattern.permute.xlu0 0
  %82 = vperm.xlu0 %81, %v79
  %v83 = vpop.permute.xlu0 %82
  %84 = vset.pattern.permute.xlu0 0
  %85 = vperm.xlu0 %84, %v80
  %v86 = vpop.permute.xlu0 %85
  %vm87 = vcmp.eq.s32.totalorder %v78, %v83
  %vm88 = vcmp.eq.s32.totalorder %v78, %v86
  %v89 = vsel %vm87, 1, 0
  %v90 = vsel %vm88, 1, 0
  %v91 = vcvt.s32.f32 %v89
  %v92 = vcvt.s32.f32 %v90
  %v93 = vadd.s32 %v59, 32
  %v94 = vadd.s32 %v59, 40
  %v95 = vadd.s32 %v59, 48
  %v96 = vadd.s32 %v59, 56
  %v97 = vld [vmem:[%s0] sm:$0x1]
  %v98 = vperm.slane %v97, 0
  %vm99 = vcmp.eq.s32.totalorder %v59, %v98
  %vm100 = vcmp.eq.s32.totalorder %v60, %v98
  %vm101 = vcmp.eq.s32.totalorder %v61, %v98
  %vm102 = vcmp.eq.s32.totalorder %v62, %v98
  %vm103 = vcmp.eq.s32.totalorder %v93, %v98
  %vm104 = vcmp.eq.s32.totalorder %v94, %v98
  %vm105 = vcmp.eq.s32.totalorder %v95, %v98
  %vm106 = vcmp.eq.s32.totalorder %v96, %v98
  %v107 = vsel %vm99, 1, 0
  %v108 = vsel %vm100, 1, 0
  %v109 = vsel %vm101, 1, 0
  %v110 = vsel %vm102, 1, 0
  %v111 = vsel %vm103, 1, 0
  %v112 = vsel %vm104, 1, 0
  %v113 = vsel %vm105, 1, 0
  %v114 = vsel %vm106, 1, 0
  %v115 = vcvt.s32.f32 %v107
  %v116 = vcvt.s32.f32 %v108
  %v117 = vcvt.s32.f32 %v109
  %v118 = vcvt.s32.f32 %v110
  %v119 = vcvt.s32.f32 %v111
  %v120 = vcvt.s32.f32 %v112
  %v121 = vcvt.s32.f32 %v113
  %v122 = vcvt.s32.f32 %v114
  %vm123 = vcmask 261120
  %v125 = vsel %vm123, %v50, 0
  %v128 = vsel %vm123, %v51, 0
  %v131 = vsel %vm123, %v52, 0
  %v134 = vsel %vm123, %v53, 0
  %136 = vmatpush.msra.mxu0 0.0
  %137 = vmatpush.msra.mxu0 0.0
  %138 = vmatpush.msra.mxu0 0.0
  %139 = vmatpush.msra.mxu0 0.0
  %140 = vmatpush.msra.mxu0 0.0
  %141 = vmatpush.msra.mxu0 0.0
  %142 = vmatpush.msra.mxu0 0.0
  %143 = vmatpush.msra.mxu0 0.0
  %144 = vmatpush.msra.mxu0 0.0
  %145 = vmatpush.msra.mxu0 0.0
  %146 = vmatpush.msra.mxu0 0.0
  %147 = vmatpush.msra.mxu0 0.0
  %148 = vmatpush.msra.mxu0 %v76
  %149 = vmatpush.msra.mxu0 %v75
  %150 = vmatpush.msra.mxu0 %v74
  %151 = vmatpush.msra.mxu0 %v73
  %152 = vmatmul.f32.gmra.mxu0 %v125
  %v153 = vpop.f32.mrf.mxu0
  %v154 = vadd.f32 0.0, %v153
  %155 = vmatmul.f32.gmra.mxu0 %v128
  %v156 = vpop.f32.mrf.mxu0
  %v157 = vadd.f32 0.0, %v156
  %158 = vmatmul.f32.gmra.mxu0 %v131
  %v159 = vpop.f32.mrf.mxu0
  %v160 = vadd.f32 0.0, %v159
  %161 = vmatmul.f32.gmra.mxu0 %v134
  %v162 = vpop.f32.mrf.mxu0
  %v163 = vadd.f32 0.0, %v162
  %164 = vdwg.mxu0
  %v166 = vsel %vm123, %v91, 0
  %v169 = vsel %vm123, %v92, 0
  %171 = vmatpush.msra.mxu0 0.0
  %172 = vmatpush.msra.mxu0 0.0
  %173 = vmatpush.msra.mxu0 0.0
  %174 = vmatpush.msra.mxu0 0.0
  %175 = vmatpush.msra.mxu0 0.0
  %176 = vmatpush.msra.mxu0 0.0
  %177 = vmatpush.msra.mxu0 0.0
  %178 = vmatpush.msra.mxu0 0.0
  %179 = vmatpush.msra.mxu0 0.0
  %180 = vmatpush.msra.mxu0 0.0
  %181 = vmatpush.msra.mxu0 0.0
  %182 = vmatpush.msra.mxu0 0.0
  %183 = vmatpush.msra.mxu0 %v53
  %184 = vmatpush.msra.mxu0 %v52
  %185 = vmatpush.msra.mxu0 %v51
  %186 = vmatpush.msra.mxu0 %v50
  %187 = vmatmul.f32.gmra.mxu0 %v166
  %v188 = vpop.f32.mrf.mxu0
  %v189 = vadd.f32 0.0, %v188
  %190 = vmatmul.f32.gmra.mxu0 %v169
  %v191 = vpop.f32.mrf.mxu0
  %v192 = vadd.f32 0.0, %v191
  %193 = vdwg.mxu0
  %194 = vmatpush.msra.mxu0 0.0
  %195 = vmatpush.msra.mxu0 0.0
  %196 = vmatpush.msra.mxu0 0.0
  %197 = vmatpush.msra.mxu0 0.0
  %198 = vmatpush.msra.mxu0 0.0
  %199 = vmatpush.msra.mxu0 0.0
  %200 = vmatpush.msra.mxu0 0.0
  %201 = vmatpush.msra.mxu0 0.0
  %202 = vmatpush.msra.mxu0 0.0
  %203 = vmatpush.msra.mxu0 0.0
  %204 = vmatpush.msra.mxu0 0.0
  %205 = vmatpush.msra.mxu0 0.0
  %206 = vmatpush.msra.mxu0 %v163
  %207 = vmatpush.msra.mxu0 %v160
  %208 = vmatpush.msra.mxu0 %v157
  %209 = vmatpush.msra.mxu0 %v154
  %210 = vmatmul.f32.gmra.mxu0 %v166
  %v211 = vpop.f32.mrf.mxu0
  %v212 = vadd.f32 0.0, %v211
  %213 = vmatmul.f32.gmra.mxu0 %v169
  %v214 = vpop.f32.mrf.mxu0
  %v215 = vadd.f32 0.0, %v214
  %216 = vdwg.mxu0
  %vm217 = vcmp.eq.s32.totalorder %v59, %v78
  %vm218 = vcmp.eq.s32.totalorder %v60, %v78
  %v219 = vmul.f32 %v212, 2.0
  %v220 = vmul.f32 %v215, 2.0
  %v222 = vsel %vm123, %v189, 0
  %v225 = vsel %vm123, %v192, 0
  %227 = vmatpush.msra.mxu0 0.0
  %228 = vmatpush.msra.mxu0 0.0
  %229 = vmatpush.msra.mxu0 0.0
  %230 = vmatpush.msra.mxu0 0.0
  %231 = vmatpush.msra.mxu0 0.0
  %232 = vmatpush.msra.mxu0 0.0
  %233 = vmatpush.msra.mxu0 0.0
  %234 = vmatpush.msra.mxu0 0.0
  %235 = vmatpush.msra.mxu0 0.0
  %236 = vmatpush.msra.mxu0 0.0
  %237 = vmatpush.msra.mxu0 0.0
  %238 = vmatpush.msra.mxu0 0.0
  %239 = vmatpush.msra.mxu0 %v163
  %240 = vmatpush.msra.mxu0 %v160
  %241 = vmatpush.msra.mxu0 %v157
  %242 = vmatpush.msra.mxu0 %v154
  %243 = vmatmul.f32.gmra.mxu0 %v222
  %v244 = vpop.f32.mrf.mxu0
  %v245 = vadd.f32 %v219, %v244
  %246 = vmatmul.f32.gmra.mxu0 %v225
  %v247 = vpop.f32.mrf.mxu0
  %v248 = vadd.f32 %v220, %v247
  %249 = vdwg.mxu0
  %v250 = vsel %vm217, 0.0, %v245
  %v251 = vsel %vm218, 0.0, %v248
  %252 = vmatpush.msra.mxu0 0.0
  %253 = vmatpush.msra.mxu0 0.0
  %254 = vmatpush.msra.mxu0 0.0
  %255 = vmatpush.msra.mxu0 0.0
  %256 = vmatpush.msra.mxu0 0.0
  %257 = vmatpush.msra.mxu0 0.0
  %258 = vmatpush.msra.mxu0 0.0
  %259 = vmatpush.msra.mxu0 0.0
  %260 = vmatpush.msra.mxu0 0.0
  %261 = vmatpush.msra.mxu0 0.0
  %262 = vmatpush.msra.mxu0 0.0
  %263 = vmatpush.msra.mxu0 0.0
  %264 = vmatpush.msra.mxu0 %v57
  %265 = vmatpush.msra.mxu0 %v56
  %266 = vmatpush.msra.mxu0 %v55
  %267 = vmatpush.msra.mxu0 %v54
  %268 = vmatmul.f32.gmra.mxu0 %v166
  %v269 = vpop.f32.mrf.mxu0
  %v270 = vadd.f32 0.0, %v269
  %271 = vmatmul.f32.gmra.mxu0 %v169
  %v272 = vpop.f32.mrf.mxu0
  %v273 = vadd.f32 0.0, %v272
  %274 = vdwg.mxu0
  %vm275 = vcmp.eq.s32.totalorder %v78, 32
  %v276 = vsel %vm275, %v270, 0.0
  %v277 = vsel %vm275, %v273, 0.0
  %278 = vadd.xlane.f32.xlu0 %v276
  %v279 = vpop.xlane.xlu0 %278
  %280 = vadd.xlane.f32.xlu0 %v277
  %v281 = vpop.xlane.xlu0 %280
  %v282 = vmul.f32 %v270, %v279
  %v283 = vmul.f32 %v273, %v281
  %v284 = vld [vmem:[%s7] sm:$0xff]
  %v285 = vld [vmem:[%s7 + $0x8] sm:$0xff]
  %v286 = vld [vmem:[%s7 + $0x10] sm:$0xff]
  %v287 = vld [vmem:[%s7 + $0x18] sm:$0xff]
  %v288 = vld [vmem:[%s7 + $0x20] sm:$0xff]
  %v289 = vld [vmem:[%s7 + $0x28] sm:$0xff]
  %v290 = vld [vmem:[%s7 + $0x30] sm:$0xff]
  %v291 = vld [vmem:[%s7 + $0x38] sm:$0xff]
  %v292 = vld [vmem:[%s7 + $0x40] sm:$0xff]
  %v293 = vld [vmem:[%s7 + $0x48] sm:$0xff]
  %v294 = vld [vmem:[%s7 + $0x50] sm:$0xff]
  %v295 = vld [vmem:[%s7 + $0x58] sm:$0xff]
  %v296 = vld [vmem:[%s7 + $0x60] sm:$0xff]
  %v297 = vld [vmem:[%s7 + $0x68] sm:$0xff]
  %v298 = vld [vmem:[%s7 + $0x70] sm:$0xff]
  %v299 = vld [vmem:[%s7 + $0x78] sm:$0xff]
  %300 = vmatpush.msra.mxu0 %v299
  %301 = vmatpush.msra.mxu0 %v298
  %302 = vmatpush.msra.mxu0 %v297
  %303 = vmatpush.msra.mxu0 %v296
  %304 = vmatpush.msra.mxu0 %v295
  %305 = vmatpush.msra.mxu0 %v294
  %306 = vmatpush.msra.mxu0 %v293
  %307 = vmatpush.msra.mxu0 %v292
  %308 = vmatpush.msra.mxu0 %v291
  %309 = vmatpush.msra.mxu0 %v290
  %310 = vmatpush.msra.mxu0 %v289
  %311 = vmatpush.msra.mxu0 %v288
  %312 = vmatpush.msra.mxu0 %v287
  %313 = vmatpush.msra.mxu0 %v286
  %314 = vmatpush.msra.mxu0 %v285
  %315 = vmatpush.msra.mxu0 %v284
  %316 = vmatmul.f32.gmra.mxu0 %v282
  %v317 = vpop.f32.mrf.mxu0
  %v318 = vadd.f32 0.0, %v317
  %319 = vmatmul.f32.gmra.mxu0 %v283
  %v320 = vpop.f32.mrf.mxu0
  %v321 = vadd.f32 0.0, %v320
  %322 = vdwg.mxu0
  %v323 = vld [vmem:[%s8] sm:$0x1]
  %vm324 = vcmask 130048
  %v325 = vsel %vm324, %v250, 0.0
  %326 = vadd.xlane.f32.xlu0 %v325
  %v327 = vpop.xlane.xlu0 %326
  %v328 = vsel %vm324, %v251, 0.0
  %329 = vadd.xlane.f32.xlu0 %v328
  %v330 = vpop.xlane.xlu0 %329
  %v331 = vadd.f32 %v327, 2.0
  %v332 = vadd.f32 %v330, 2.0
  %v333 = vrsqrt.pop %v331
  %v334 = vmul.f32 %v333, %v331
  %v335 = vmul.f32 %v334, %v333
  %v336 = vmul.f32 0.5, %v335
  %v337 = vsub.f32 1.5, %v336
  %v338 = vmul.f32 %v333, %v337
  %vm339 = vweird.f32 %v331
  %vm340 = vweird.f32 %v333
  %vm341 = vmor %vm339, %vm340
  %v342 = vsel %vm341, %v333, %v338
  %v343 = vrsqrt.pop %v332
  %v344 = vmul.f32 %v343, %v332
  %v345 = vmul.f32 %v344, %v343
  %v346 = vmul.f32 0.5, %v345
  %v347 = vsub.f32 1.5, %v346
  %v348 = vmul.f32 %v343, %v347
  %vm349 = vweird.f32 %v332
  %vm350 = vweird.f32 %v343
  %vm351 = vmor %vm349, %vm350
  %v352 = vsel %vm351, %v343, %v348
  %v353 = vmul.f32 %v342, %v318
  %v354 = vmul.f32 %v352, %v321
  %v356 = vsel %vm324, %v250, 0
  %v359 = vsel %vm324, %v251, 0
  %361 = vmatpush.msra.mxu0 0.0
  %362 = vmatpush.msra.mxu0 0.0
  %363 = vmatpush.msra.mxu0 0.0
  %364 = vmatpush.msra.mxu0 0.0
  %365 = vmatpush.msra.mxu0 0.0
  %366 = vmatpush.msra.mxu0 0.0
  %367 = vmatpush.msra.mxu0 0.0
  %368 = vmatpush.msra.mxu0 0.0
  %369 = vmatpush.msra.mxu0 0.0
  %370 = vmatpush.msra.mxu0 0.0
  %371 = vmatpush.msra.mxu0 0.0
  %372 = vmatpush.msra.mxu0 0.0
  %373 = vmatpush.msra.mxu0 0.0
  %374 = vmatpush.msra.mxu0 0.0
  %375 = vmatpush.msra.mxu0 %v354
  %376 = vmatpush.msra.mxu0 %v353
  %377 = vmatmul.f32.gmra.mxu0 %v356
  %v378 = vpop.f32.mrf.mxu0
  %v379 = vadd.f32 0.0, %v378
  %380 = vmatmul.f32.gmra.mxu0 %v359
  %v381 = vpop.f32.mrf.mxu0
  %v382 = vadd.f32 0.0, %v381
  %383 = vdwg.mxu0
  %v384 = vmul.f32 %v342, %v379
  %v385 = vmul.f32 %v352, %v382
  %v386 = vmul.f32 %v342, 2.0
  %v387 = vmul.f32 %v352, 2.0
  %v388 = vmul.f32 %v386, %v342
  %v389 = vmul.f32 %v387, %v352
  %v390 = vmul.f32 %v388, %v318
  %v391 = vmul.f32 %v389, %v321
  %v392 = vadd.f32 %v384, %v390
  %v393 = vadd.f32 %v385, %v391
  %v395 = vperm.slane %v323, 0
  %v397 = vadd.f32 %v392, %v395
  %v398 = vadd.f32 %v393, %v395
  %v399 = vmax.f32 %v397, 0.0
  %v400 = vmax.f32 %v398, 0.0
  %v401 = vld [vmem:[%s10] sm:$0xff]
  %v402 = vld [vmem:[%s10 + $0x8] sm:$0xff]
  %v403 = vld [vmem:[%s10 + $0x10] sm:$0xff]
  %v404 = vld [vmem:[%s10 + $0x18] sm:$0xff]
  %v405 = vld [vmem:[%s10 + $0x20] sm:$0xff]
  %v406 = vld [vmem:[%s10 + $0x28] sm:$0xff]
  %v407 = vld [vmem:[%s10 + $0x30] sm:$0xff]
  %v408 = vld [vmem:[%s10 + $0x38] sm:$0xff]
  %v409 = vld [vmem:[%s10 + $0x40] sm:$0xff]
  %v410 = vld [vmem:[%s10 + $0x48] sm:$0xff]
  %v411 = vld [vmem:[%s10 + $0x50] sm:$0xff]
  %v412 = vld [vmem:[%s10 + $0x58] sm:$0xff]
  %v413 = vld [vmem:[%s10 + $0x60] sm:$0xff]
  %v414 = vld [vmem:[%s10 + $0x68] sm:$0xff]
  %v415 = vld [vmem:[%s10 + $0x70] sm:$0xff]
  %v416 = vld [vmem:[%s10 + $0x78] sm:$0xff]
  %417 = vmatpush.msra.mxu0 %v416
  %418 = vmatpush.msra.mxu0 %v415
  %419 = vmatpush.msra.mxu0 %v414
  %420 = vmatpush.msra.mxu0 %v413
  %421 = vmatpush.msra.mxu0 %v412
  %422 = vmatpush.msra.mxu0 %v411
  %423 = vmatpush.msra.mxu0 %v410
  %424 = vmatpush.msra.mxu0 %v409
  %425 = vmatpush.msra.mxu0 %v408
  %426 = vmatpush.msra.mxu0 %v407
  %427 = vmatpush.msra.mxu0 %v406
  %428 = vmatpush.msra.mxu0 %v405
  %429 = vmatpush.msra.mxu0 %v404
  %430 = vmatpush.msra.mxu0 %v403
  %431 = vmatpush.msra.mxu0 %v402
  %432 = vmatpush.msra.mxu0 %v401
  %433 = vmatmul.f32.gmra.mxu0 %v399
  %v434 = vpop.f32.mrf.mxu0
  %v435 = vadd.f32 0.0, %v434
  %436 = vmatmul.f32.gmra.mxu0 %v400
  %v437 = vpop.f32.mrf.mxu0
  %v438 = vadd.f32 0.0, %v437
  %439 = vdwg.mxu0
  %v440 = vld [vmem:[%s9] sm:$0xff]
  %v441 = vld [vmem:[%s9 + $0x8] sm:$0xff]
  %v442 = vld [vmem:[%s9 + $0x10] sm:$0xff]
  %v443 = vld [vmem:[%s9 + $0x18] sm:$0xff]
  %v444 = vld [vmem:[%s9 + $0x20] sm:$0xff]
  %v445 = vld [vmem:[%s9 + $0x28] sm:$0xff]
  %v446 = vld [vmem:[%s9 + $0x30] sm:$0xff]
  %v447 = vld [vmem:[%s9 + $0x38] sm:$0xff]
  %v448 = vld [vmem:[%s9 + $0x40] sm:$0xff]
  %v449 = vld [vmem:[%s9 + $0x48] sm:$0xff]
  %v450 = vld [vmem:[%s9 + $0x50] sm:$0xff]
  %v451 = vld [vmem:[%s9 + $0x58] sm:$0xff]
  %v452 = vld [vmem:[%s9 + $0x60] sm:$0xff]
  %v453 = vld [vmem:[%s9 + $0x68] sm:$0xff]
  %v454 = vld [vmem:[%s9 + $0x70] sm:$0xff]
  %v455 = vld [vmem:[%s9 + $0x78] sm:$0xff]
  %v457 = vsel %vm324, %v73, 0
  %v460 = vsel %vm324, %v74, 0
  %v463 = vsel %vm324, %v75, 0
  %v466 = vsel %vm324, %v76, 0
  %468 = vmatpush.msra.mxu0 0.0
  %469 = vmatpush.msra.mxu0 0.0
  %470 = vmatpush.msra.mxu0 0.0
  %471 = vmatpush.msra.mxu0 0.0
  %472 = vmatpush.msra.mxu0 0.0
  %473 = vmatpush.msra.mxu0 0.0
  %474 = vmatpush.msra.mxu0 0.0
  %475 = vmatpush.msra.mxu0 0.0
  %476 = vmatpush.msra.mxu0 0.0
  %477 = vmatpush.msra.mxu0 0.0
  %478 = vmatpush.msra.mxu0 0.0
  %479 = vmatpush.msra.mxu0 0.0
  %480 = vmatpush.msra.mxu0 0.0
  %481 = vmatpush.msra.mxu0 0.0
  %482 = vmatpush.msra.mxu0 %v438
  %483 = vmatpush.msra.mxu0 %v435
  %484 = vmatmul.f32.gmra.mxu0 %v457
  %v485 = vpop.f32.mrf.mxu0
  %v486 = vadd.f32 0.0, %v485
  %487 = vmatmul.f32.gmra.mxu0 %v460
  %v488 = vpop.f32.mrf.mxu0
  %v489 = vadd.f32 0.0, %v488
  %490 = vmatmul.f32.gmra.mxu0 %v463
  %v491 = vpop.f32.mrf.mxu0
  %v492 = vadd.f32 0.0, %v491
  %493 = vmatmul.f32.gmra.mxu0 %v466
  %v494 = vpop.f32.mrf.mxu0
  %v495 = vadd.f32 0.0, %v494
  %496 = vdwg.mxu0
  %497 = vmatpush.msra.mxu0 %v455
  %498 = vmatpush.msra.mxu0 %v454
  %499 = vmatpush.msra.mxu0 %v453
  %500 = vmatpush.msra.mxu0 %v452
  %501 = vmatpush.msra.mxu0 %v451
  %502 = vmatpush.msra.mxu0 %v450
  %503 = vmatpush.msra.mxu0 %v449
  %504 = vmatpush.msra.mxu0 %v448
  %505 = vmatpush.msra.mxu0 %v447
  %506 = vmatpush.msra.mxu0 %v446
  %507 = vmatpush.msra.mxu0 %v445
  %508 = vmatpush.msra.mxu0 %v444
  %509 = vmatpush.msra.mxu0 %v443
  %510 = vmatpush.msra.mxu0 %v442
  %511 = vmatpush.msra.mxu0 %v441
  %512 = vmatpush.msra.mxu0 %v440
  %513 = vmatmul.f32.gmra.mxu0 %v54
  %v514 = vpop.f32.mrf.mxu0
  %v515 = vadd.f32 %v486, %v514
  %516 = vmatmul.f32.gmra.mxu0 %v55
  %v517 = vpop.f32.mrf.mxu0
  %v518 = vadd.f32 %v489, %v517
  %519 = vmatmul.f32.gmra.mxu0 %v56
  %v520 = vpop.f32.mrf.mxu0
  %v521 = vadd.f32 %v492, %v520
  %522 = vmatmul.f32.gmra.mxu0 %v57
  %v523 = vpop.f32.mrf.mxu0
  %v524 = vadd.f32 %v495, %v523
  %525 = vdwg.mxu0
  %v526 = vld [vmem:[%s11] sm:$0x1]
  %v527 = vsel %vm123, %v50, 0.0
  %528 = vadd.xlane.f32.xlu0 %v527
  %v529 = vpop.xlane.xlu0 %528
  %v530 = vsel %vm123, %v51, 0.0
  %531 = vadd.xlane.f32.xlu0 %v530
  %v532 = vpop.xlane.xlu0 %531
  %v533 = vsel %vm123, %v52, 0.0
  %534 = vadd.xlane.f32.xlu0 %v533
  %v535 = vpop.xlane.xlu0 %534
  %v536 = vsel %vm123, %v53, 0.0
  %537 = vadd.xlane.f32.xlu0 %v536
  %v538 = vpop.xlane.xlu0 %537
  %v539 = vadd.f32 %v529, 2.0
  %v540 = vadd.f32 %v532, 2.0
  %v541 = vadd.f32 %v535, 2.0
  %v542 = vadd.f32 %v538, 2.0
  %v543 = vrsqrt.pop %v539
  %v544 = vmul.f32 %v543, %v539
  %v545 = vmul.f32 %v544, %v543
  %v546 = vmul.f32 0.5, %v545
  %v547 = vsub.f32 1.5, %v546
  %v548 = vmul.f32 %v543, %v547
  %vm549 = vweird.f32 %v539
  %vm550 = vweird.f32 %v543
  %vm551 = vmor %vm549, %vm550
  %v552 = vsel %vm551, %v543, %v548
  %v553 = vrsqrt.pop %v540
  %v554 = vmul.f32 %v553, %v540
  %v555 = vmul.f32 %v554, %v553
  %v556 = vmul.f32 0.5, %v555
  %v557 = vsub.f32 1.5, %v556
  %v558 = vmul.f32 %v553, %v557
  %vm559 = vweird.f32 %v540
  %vm560 = vweird.f32 %v553
  %vm561 = vmor %vm559, %vm560
  %v562 = vsel %vm561, %v553, %v558
  %v563 = vrsqrt.pop %v541
  %v564 = vmul.f32 %v563, %v541
  %v565 = vmul.f32 %v564, %v563
  %v566 = vmul.f32 0.5, %v565
  %v567 = vsub.f32 1.5, %v566
  %v568 = vmul.f32 %v563, %v567
  %vm569 = vweird.f32 %v541
  %vm570 = vweird.f32 %v563
  %vm571 = vmor %vm569, %vm570
  %v572 = vsel %vm571, %v563, %v568
  %v573 = vrsqrt.pop %v542
  %v574 = vmul.f32 %v573, %v542
  %v575 = vmul.f32 %v574, %v573
  %v576 = vmul.f32 0.5, %v575
  %v577 = vsub.f32 1.5, %v576
  %v578 = vmul.f32 %v573, %v577
  %vm579 = vweird.f32 %v542
  %vm580 = vweird.f32 %v573
  %vm581 = vmor %vm579, %vm580
  %v582 = vsel %vm581, %v573, %v578
  %v583 = vmul.f32 %v552, %v515
  %v584 = vmul.f32 %v562, %v518
  %v585 = vmul.f32 %v572, %v521
  %v586 = vmul.f32 %v582, %v524
  %587 = vmatpush.msra.mxu0 0.0
  %588 = vmatpush.msra.mxu0 0.0
  %589 = vmatpush.msra.mxu0 0.0
  %590 = vmatpush.msra.mxu0 0.0
  %591 = vmatpush.msra.mxu0 0.0
  %592 = vmatpush.msra.mxu0 0.0
  %593 = vmatpush.msra.mxu0 0.0
  %594 = vmatpush.msra.mxu0 0.0
  %595 = vmatpush.msra.mxu0 0.0
  %596 = vmatpush.msra.mxu0 0.0
  %597 = vmatpush.msra.mxu0 0.0
  %598 = vmatpush.msra.mxu0 0.0
  %599 = vmatpush.msra.mxu0 %v586
  %600 = vmatpush.msra.mxu0 %v585
  %601 = vmatpush.msra.mxu0 %v584
  %602 = vmatpush.msra.mxu0 %v583
  %603 = vmatmul.f32.gmra.mxu0 %v125
  %v604 = vpop.f32.mrf.mxu0
  %v605 = vadd.f32 0.0, %v604
  %606 = vmatmul.f32.gmra.mxu0 %v128
  %v607 = vpop.f32.mrf.mxu0
  %v608 = vadd.f32 0.0, %v607
  %609 = vmatmul.f32.gmra.mxu0 %v131
  %v610 = vpop.f32.mrf.mxu0
  %v611 = vadd.f32 0.0, %v610
  %612 = vmatmul.f32.gmra.mxu0 %v134
  %v613 = vpop.f32.mrf.mxu0
  %v614 = vadd.f32 0.0, %v613
  %615 = vdwg.mxu0
  %v616 = vmul.f32 %v552, %v605
  %v617 = vmul.f32 %v562, %v608
  %v618 = vmul.f32 %v572, %v611
  %v619 = vmul.f32 %v582, %v614
  %v620 = vmul.f32 %v552, 2.0
  %v621 = vmul.f32 %v562, 2.0
  %v622 = vmul.f32 %v572, 2.0
  %v623 = vmul.f32 %v582, 2.0
  %v624 = vmul.f32 %v620, %v552
  %v625 = vmul.f32 %v621, %v562
  %v626 = vmul.f32 %v622, %v572
  %v627 = vmul.f32 %v623, %v582
  %v628 = vmul.f32 %v624, %v515
  %v629 = vmul.f32 %v625, %v518
  %v630 = vmul.f32 %v626, %v521
  %v631 = vmul.f32 %v627, %v524
  %v632 = vadd.f32 %v616, %v628
  %v633 = vadd.f32 %v617, %v629
  %v634 = vadd.f32 %v618, %v630
  %v635 = vadd.f32 %v619, %v631
  %v637 = vperm.slane %v526, 0
  %v639 = vadd.f32 %v632, %v637
  %v640 = vadd.f32 %v633, %v637
  %v641 = vadd.f32 %v634, %v637
  %v642 = vadd.f32 %v635, %v637
  %v643 = vmax.f32 %v639, 0.0
  %v644 = vmax.f32 %v640, 0.0
  %v645 = vmax.f32 %v641, 0.0
  %v646 = vmax.f32 %v642, 0.0
  %v647 = vld [vmem:[%s13] sm:$0xff]
  %v648 = vld [vmem:[%s13 + $0x8] sm:$0xff]
  %v649 = vld [vmem:[%s13 + $0x10] sm:$0xff]
  %v650 = vld [vmem:[%s13 + $0x18] sm:$0xff]
  %v651 = vld [vmem:[%s13 + $0x20] sm:$0xff]
  %v652 = vld [vmem:[%s13 + $0x28] sm:$0xff]
  %v653 = vld [vmem:[%s13 + $0x30] sm:$0xff]
  %v654 = vld [vmem:[%s13 + $0x38] sm:$0xff]
  %v655 = vld [vmem:[%s13 + $0x40] sm:$0xff]
  %v656 = vld [vmem:[%s13 + $0x48] sm:$0xff]
  %v657 = vld [vmem:[%s13 + $0x50] sm:$0xff]
  %v658 = vld [vmem:[%s13 + $0x58] sm:$0xff]
  %v659 = vld [vmem:[%s13 + $0x60] sm:$0xff]
  %v660 = vld [vmem:[%s13 + $0x68] sm:$0xff]
  %v661 = vld [vmem:[%s13 + $0x70] sm:$0xff]
  %v662 = vld [vmem:[%s13 + $0x78] sm:$0xff]
  %663 = vmatpush.msra.mxu0 %v662
  %664 = vmatpush.msra.mxu0 %v661
  %665 = vmatpush.msra.mxu0 %v660
  %666 = vmatpush.msra.mxu0 %v659
  %667 = vmatpush.msra.mxu0 %v658
  %668 = vmatpush.msra.mxu0 %v657
  %669 = vmatpush.msra.mxu0 %v656
  %670 = vmatpush.msra.mxu0 %v655
  %671 = vmatpush.msra.mxu0 %v654
  %672 = vmatpush.msra.mxu0 %v653
  %673 = vmatpush.msra.mxu0 %v652
  %674 = vmatpush.msra.mxu0 %v651
  %675 = vmatpush.msra.mxu0 %v650
  %676 = vmatpush.msra.mxu0 %v649
  %677 = vmatpush.msra.mxu0 %v648
  %678 = vmatpush.msra.mxu0 %v647
  %679 = vmatmul.f32.gmra.mxu0 %v643
  %v680 = vpop.f32.mrf.mxu0
  %v681 = vadd.f32 0.0, %v680
  %682 = vmatmul.f32.gmra.mxu0 %v644
  %v683 = vpop.f32.mrf.mxu0
  %v684 = vadd.f32 0.0, %v683
  %685 = vmatmul.f32.gmra.mxu0 %v645
  %v686 = vpop.f32.mrf.mxu0
  %v687 = vadd.f32 0.0, %v686
  %688 = vmatmul.f32.gmra.mxu0 %v646
  %v689 = vpop.f32.mrf.mxu0
  %v690 = vadd.f32 0.0, %v689
  %691 = vdwg.mxu0
  %v692 = vld [vmem:[%s5] sm:$0xff]
  %v693 = vld [vmem:[%s5 + $0x8] sm:$0xff]
  %v694 = vld [vmem:[%s5 + $0x10] sm:$0xff]
  %v695 = vld [vmem:[%s5 + $0x18] sm:$0xff]
  %v696 = vld [vmem:[%s5 + $0x20] sm:$0xff]
  %v697 = vld [vmem:[%s5 + $0x28] sm:$0xff]
  %v698 = vld [vmem:[%s5 + $0x30] sm:$0xff]
  %v699 = vld [vmem:[%s5 + $0x38] sm:$0xff]
  %v700 = vld [vmem:[%s12] sm:$0xff]
  %v701 = vld [vmem:[%s12 + $0x8] sm:$0xff]
  %v702 = vld [vmem:[%s12 + $0x10] sm:$0xff]
  %v703 = vld [vmem:[%s12 + $0x18] sm:$0xff]
  %v704 = vld [vmem:[%s12 + $0x20] sm:$0xff]
  %v705 = vld [vmem:[%s12 + $0x28] sm:$0xff]
  %v706 = vld [vmem:[%s12 + $0x30] sm:$0xff]
  %v707 = vld [vmem:[%s12 + $0x38] sm:$0xff]
  %v708 = vld [vmem:[%s12 + $0x40] sm:$0xff]
  %v709 = vld [vmem:[%s12 + $0x48] sm:$0xff]
  %v710 = vld [vmem:[%s12 + $0x50] sm:$0xff]
  %v711 = vld [vmem:[%s12 + $0x58] sm:$0xff]
  %v712 = vld [vmem:[%s12 + $0x60] sm:$0xff]
  %v713 = vld [vmem:[%s12 + $0x68] sm:$0xff]
  %v714 = vld [vmem:[%s12 + $0x70] sm:$0xff]
  %v715 = vld [vmem:[%s12 + $0x78] sm:$0xff]
  %v717 = vsel %vm123, %v115, 0
  %v720 = vsel %vm123, %v116, 0
  %v723 = vsel %vm123, %v117, 0
  %v726 = vsel %vm123, %v118, 0
  %v729 = vsel %vm123, %v119, 0
  %v732 = vsel %vm123, %v120, 0
  %v735 = vsel %vm123, %v121, 0
  %v738 = vsel %vm123, %v122, 0
  %740 = vmatpush.msra.mxu0 0.0
  %741 = vmatpush.msra.mxu0 0.0
  %742 = vmatpush.msra.mxu0 0.0
  %743 = vmatpush.msra.mxu0 0.0
  %744 = vmatpush.msra.mxu0 0.0
  %745 = vmatpush.msra.mxu0 0.0
  %746 = vmatpush.msra.mxu0 0.0
  %747 = vmatpush.msra.mxu0 0.0
  %748 = vmatpush.msra.mxu0 0.0
  %749 = vmatpush.msra.mxu0 0.0
  %750 = vmatpush.msra.mxu0 0.0
  %751 = vmatpush.msra.mxu0 0.0
  %752 = vmatpush.msra.mxu0 %v690
  %753 = vmatpush.msra.mxu0 %v687
  %754 = vmatpush.msra.mxu0 %v684
  %755 = vmatpush.msra.mxu0 %v681
  %756 = vmatmul.f32.gmra.mxu0 %v717
  %v757 = vpop.f32.mrf.mxu0
  %v758 = vadd.f32 0.0, %v757
  %759 = vmatmul.f32.gmra.mxu0 %v720
  %v760 = vpop.f32.mrf.mxu0
  %v761 = vadd.f32 0.0, %v760
  %762 = vmatmul.f32.gmra.mxu0 %v723
  %v763 = vpop.f32.mrf.mxu0
  %v764 = vadd.f32 0.0, %v763
  %765 = vmatmul.f32.gmra.mxu0 %v726
  %v766 = vpop.f32.mrf.mxu0
  %v767 = vadd.f32 0.0, %v766
  %768 = vmatmul.f32.gmra.mxu0 %v729
  %v769 = vpop.f32.mrf.mxu0
  %v770 = vadd.f32 0.0, %v769
  %771 = vmatmul.f32.gmra.mxu0 %v732
  %v772 = vpop.f32.mrf.mxu0
  %v773 = vadd.f32 0.0, %v772
  %774 = vmatmul.f32.gmra.mxu0 %v735
  %v775 = vpop.f32.mrf.mxu0
  %v776 = vadd.f32 0.0, %v775
  %777 = vmatmul.f32.gmra.mxu0 %v738
  %v778 = vpop.f32.mrf.mxu0
  %v779 = vadd.f32 0.0, %v778
  %780 = vdwg.mxu0
  %781 = vmatpush.msra.mxu0 %v715
  %782 = vmatpush.msra.mxu0 %v714
  %783 = vmatpush.msra.mxu0 %v713
  %784 = vmatpush.msra.mxu0 %v712
  %785 = vmatpush.msra.mxu0 %v711
  %786 = vmatpush.msra.mxu0 %v710
  %787 = vmatpush.msra.mxu0 %v709
  %788 = vmatpush.msra.mxu0 %v708
  %789 = vmatpush.msra.mxu0 %v707
  %790 = vmatpush.msra.mxu0 %v706
  %791 = vmatpush.msra.mxu0 %v705
  %792 = vmatpush.msra.mxu0 %v704
  %793 = vmatpush.msra.mxu0 %v703
  %794 = vmatpush.msra.mxu0 %v702
  %795 = vmatpush.msra.mxu0 %v701
  %796 = vmatpush.msra.mxu0 %v700
  %797 = vmatmul.f32.gmra.mxu0 %v692
  %v798 = vpop.f32.mrf.mxu0
  %v799 = vadd.f32 %v758, %v798
  %800 = vmatmul.f32.gmra.mxu0 %v693
  %v801 = vpop.f32.mrf.mxu0
  %v802 = vadd.f32 %v761, %v801
  %803 = vmatmul.f32.gmra.mxu0 %v694
  %v804 = vpop.f32.mrf.mxu0
  %v805 = vadd.f32 %v764, %v804
  %806 = vmatmul.f32.gmra.mxu0 %v695
  %v807 = vpop.f32.mrf.mxu0
  %v808 = vadd.f32 %v767, %v807
  %809 = vmatmul.f32.gmra.mxu0 %v696
  %v810 = vpop.f32.mrf.mxu0
  %v811 = vadd.f32 %v770, %v810
  %812 = vmatmul.f32.gmra.mxu0 %v697
  %v813 = vpop.f32.mrf.mxu0
  %v814 = vadd.f32 %v773, %v813
  %815 = vmatmul.f32.gmra.mxu0 %v698
  %v816 = vpop.f32.mrf.mxu0
  %v817 = vadd.f32 %v776, %v816
  %818 = vmatmul.f32.gmra.mxu0 %v699
  %v819 = vpop.f32.mrf.mxu0
  %v820 = vadd.f32 %v779, %v819
  %821 = vdwg.mxu0
  %v822 = vld [vmem:[%s3] sm:$0xff]
  %v823 = vld [vmem:[%s3 + $0x8] sm:$0xff]
  %v824 = vld [vmem:[%s3 + $0x10] sm:$0xff]
  %v825 = vld [vmem:[%s3 + $0x18] sm:$0xff]
  %v826 = vld [vmem:[%s3 + $0x20] sm:$0xff]
  %v827 = vld [vmem:[%s3 + $0x28] sm:$0xff]
  %v828 = vld [vmem:[%s3 + $0x30] sm:$0xff]
  %v829 = vld [vmem:[%s3 + $0x38] sm:$0xff]
  %v830 = vld [vmem:[%s14] sm:$0x1]
  %vm831 = vcmask 523264
  %v832 = vsel %vm831, %v822, 0.0
  %833 = vadd.xlane.f32.xlu0 %v832
  %v834 = vpop.xlane.xlu0 %833
  %v835 = vsel %vm831, %v823, 0.0
  %836 = vadd.xlane.f32.xlu0 %v835
  %v837 = vpop.xlane.xlu0 %836
  %v838 = vsel %vm831, %v824, 0.0
  %839 = vadd.xlane.f32.xlu0 %v838
  %v840 = vpop.xlane.xlu0 %839
  %v841 = vsel %vm831, %v825, 0.0
  %842 = vadd.xlane.f32.xlu0 %v841
  %v843 = vpop.xlane.xlu0 %842
  %v844 = vsel %vm831, %v826, 0.0
  %845 = vadd.xlane.f32.xlu0 %v844
  %v846 = vpop.xlane.xlu0 %845
  %v847 = vsel %vm831, %v827, 0.0
  %848 = vadd.xlane.f32.xlu0 %v847
  %v849 = vpop.xlane.xlu0 %848
  %v850 = vsel %vm831, %v828, 0.0
  %851 = vadd.xlane.f32.xlu0 %v850
  %v852 = vpop.xlane.xlu0 %851
  %v853 = vsel %vm831, %v829, 0.0
  %854 = vadd.xlane.f32.xlu0 %v853
  %v855 = vpop.xlane.xlu0 %854
  %v856 = vadd.f32 %v834, 2.0
  %v857 = vadd.f32 %v837, 2.0
  %v858 = vadd.f32 %v840, 2.0
  %v859 = vadd.f32 %v843, 2.0
  %v860 = vadd.f32 %v846, 2.0
  %v861 = vadd.f32 %v849, 2.0
  %v862 = vadd.f32 %v852, 2.0
  %v863 = vadd.f32 %v855, 2.0
  %v864 = vrsqrt.pop %v856
  %v865 = vmul.f32 %v864, %v856
  %v866 = vmul.f32 %v865, %v864
  %v867 = vmul.f32 0.5, %v866
  %v868 = vsub.f32 1.5, %v867
  %v869 = vmul.f32 %v864, %v868
  %vm870 = vweird.f32 %v856
  %vm871 = vweird.f32 %v864
  %vm872 = vmor %vm870, %vm871
  %v873 = vsel %vm872, %v864, %v869
  %v874 = vrsqrt.pop %v857
  %v875 = vmul.f32 %v874, %v857
  %v876 = vmul.f32 %v875, %v874
  %v877 = vmul.f32 0.5, %v876
  %v878 = vsub.f32 1.5, %v877
  %v879 = vmul.f32 %v874, %v878
  %vm880 = vweird.f32 %v857
  %vm881 = vweird.f32 %v874
  %vm882 = vmor %vm880, %vm881
  %v883 = vsel %vm882, %v874, %v879
  %v884 = vrsqrt.pop %v858
  %v885 = vmul.f32 %v884, %v858
  %v886 = vmul.f32 %v885, %v884
  %v887 = vmul.f32 0.5, %v886
  %v888 = vsub.f32 1.5, %v887
  %v889 = vmul.f32 %v884, %v888
  %vm890 = vweird.f32 %v858
  %vm891 = vweird.f32 %v884
  %vm892 = vmor %vm890, %vm891
  %v893 = vsel %vm892, %v884, %v889
  %v894 = vrsqrt.pop %v859
  %v895 = vmul.f32 %v894, %v859
  %v896 = vmul.f32 %v895, %v894
  %v897 = vmul.f32 0.5, %v896
  %v898 = vsub.f32 1.5, %v897
  %v899 = vmul.f32 %v894, %v898
  %vm900 = vweird.f32 %v859
  %vm901 = vweird.f32 %v894
  %vm902 = vmor %vm900, %vm901
  %v903 = vsel %vm902, %v894, %v899
  %v904 = vrsqrt.pop %v860
  %v905 = vmul.f32 %v904, %v860
  %v906 = vmul.f32 %v905, %v904
  %v907 = vmul.f32 0.5, %v906
  %v908 = vsub.f32 1.5, %v907
  %v909 = vmul.f32 %v904, %v908
  %vm910 = vweird.f32 %v860
  %vm911 = vweird.f32 %v904
  %vm912 = vmor %vm910, %vm911
  %v913 = vsel %vm912, %v904, %v909
  %v914 = vrsqrt.pop %v861
  %v915 = vmul.f32 %v914, %v861
  %v916 = vmul.f32 %v915, %v914
  %v917 = vmul.f32 0.5, %v916
  %v918 = vsub.f32 1.5, %v917
  %v919 = vmul.f32 %v914, %v918
  %vm920 = vweird.f32 %v861
  %vm921 = vweird.f32 %v914
  %vm922 = vmor %vm920, %vm921
  %v923 = vsel %vm922, %v914, %v919
  %v924 = vrsqrt.pop %v862
  %v925 = vmul.f32 %v924, %v862
  %v926 = vmul.f32 %v925, %v924
  %v927 = vmul.f32 0.5, %v926
  %v928 = vsub.f32 1.5, %v927
  %v929 = vmul.f32 %v924, %v928
  %vm930 = vweird.f32 %v862
  %vm931 = vweird.f32 %v924
  %vm932 = vmor %vm930, %vm931
  %v933 = vsel %vm932, %v924, %v929
  %v934 = vrsqrt.pop %v863
  %v935 = vmul.f32 %v934, %v863
  %v936 = vmul.f32 %v935, %v934
  %v937 = vmul.f32 0.5, %v936
  %v938 = vsub.f32 1.5, %v937
  %v939 = vmul.f32 %v934, %v938
  %vm940 = vweird.f32 %v863
  %vm941 = vweird.f32 %v934
  %vm942 = vmor %vm940, %vm941
  %v943 = vsel %vm942, %v934, %v939
  %v944 = vmul.f32 %v873, %v799
  %v945 = vmul.f32 %v883, %v802
  %v946 = vmul.f32 %v893, %v805
  %v947 = vmul.f32 %v903, %v808
  %v948 = vmul.f32 %v913, %v811
  %v949 = vmul.f32 %v923, %v814
  %v950 = vmul.f32 %v933, %v817
  %v951 = vmul.f32 %v943, %v820
  %v953 = vsel %vm831, %v822, 0
  %v956 = vsel %vm831, %v823, 0
  %v959 = vsel %vm831, %v824, 0
  %v962 = vsel %vm831, %v825, 0
  %v965 = vsel %vm831, %v826, 0
  %v968 = vsel %vm831, %v827, 0
  %v971 = vsel %vm831, %v828, 0
  %v974 = vsel %vm831, %v829, 0
  %976 = vmatpush.msra.mxu0 0.0
  %977 = vmatpush.msra.mxu0 0.0
  %978 = vmatpush.msra.mxu0 0.0
  %979 = vmatpush.msra.mxu0 0.0
  %980 = vmatpush.msra.mxu0 0.0
  %981 = vmatpush.msra.mxu0 0.0
  %982 = vmatpush.msra.mxu0 0.0
  %983 = vmatpush.msra.mxu0 0.0
  %984 = vmatpush.msra.mxu0 %v951
  %985 = vmatpush.msra.mxu0 %v950
  %986 = vmatpush.msra.mxu0 %v949
  %987 = vmatpush.msra.mxu0 %v948
  %988 = vmatpush.msra.mxu0 %v947
  %989 = vmatpush.msra.mxu0 %v946
  %990 = vmatpush.msra.mxu0 %v945
  %991 = vmatpush.msra.mxu0 %v944
  %992 = vmatmul.f32.gmra.mxu0 %v953
  %v993 = vpop.f32.mrf.mxu0
  %v994 = vadd.f32 0.0, %v993
  %995 = vmatmul.f32.gmra.mxu0 %v956
  %v996 = vpop.f32.mrf.mxu0
  %v997 = vadd.f32 0.0, %v996
  %998 = vmatmul.f32.gmra.mxu0 %v959
  %v999 = vpop.f32.mrf.mxu0
  %v1000 = vadd.f32 0.0, %v999
  %1001 = vmatmul.f32.gmra.mxu0 %v962
  %v1002 = vpop.f32.mrf.mxu0
  %v1003 = vadd.f32 0.0, %v1002
  %1004 = vmatmul.f32.gmra.mxu0 %v965
  %v1005 = vpop.f32.mrf.mxu0
  %v1006 = vadd.f32 0.0, %v1005
  %1007 = vmatmul.f32.gmra.mxu0 %v968
  %v1008 = vpop.f32.mrf.mxu0
  %v1009 = vadd.f32 0.0, %v1008
  %1010 = vmatmul.f32.gmra.mxu0 %v971
  %v1011 = vpop.f32.mrf.mxu0
  %v1012 = vadd.f32 0.0, %v1011
  %1013 = vmatmul.f32.gmra.mxu0 %v974
  %v1014 = vpop.f32.mrf.mxu0
  %v1015 = vadd.f32 0.0, %v1014
  %1016 = vdwg.mxu0
  %v1017 = vmul.f32 %v873, %v994
  %v1018 = vmul.f32 %v883, %v997
  %v1019 = vmul.f32 %v893, %v1000
  %v1020 = vmul.f32 %v903, %v1003
  %v1021 = vmul.f32 %v913, %v1006
  %v1022 = vmul.f32 %v923, %v1009
  %v1023 = vmul.f32 %v933, %v1012
  %v1024 = vmul.f32 %v943, %v1015
  %v1025 = vmul.f32 %v873, 2.0
  %v1026 = vmul.f32 %v883, 2.0
  %v1027 = vmul.f32 %v893, 2.0
  %v1028 = vmul.f32 %v903, 2.0
  %v1029 = vmul.f32 %v913, 2.0
  %v1030 = vmul.f32 %v923, 2.0
  %v1031 = vmul.f32 %v933, 2.0
  %v1032 = vmul.f32 %v943, 2.0
  %v1033 = vmul.f32 %v1025, %v873
  %v1034 = vmul.f32 %v1026, %v883
  %v1035 = vmul.f32 %v1027, %v893
  %v1036 = vmul.f32 %v1028, %v903
  %v1037 = vmul.f32 %v1029, %v913
  %v1038 = vmul.f32 %v1030, %v923
  %v1039 = vmul.f32 %v1031, %v933
  %v1040 = vmul.f32 %v1032, %v943
  %v1041 = vmul.f32 %v1033, %v799
  %v1042 = vmul.f32 %v1034, %v802
  %v1043 = vmul.f32 %v1035, %v805
  %v1044 = vmul.f32 %v1036, %v808
  %v1045 = vmul.f32 %v1037, %v811
  %v1046 = vmul.f32 %v1038, %v814
  %v1047 = vmul.f32 %v1039, %v817
  %v1048 = vmul.f32 %v1040, %v820
  %v1049 = vadd.f32 %v1017, %v1041
  %v1050 = vadd.f32 %v1018, %v1042
  %v1051 = vadd.f32 %v1019, %v1043
  %v1052 = vadd.f32 %v1020, %v1044
  %v1053 = vadd.f32 %v1021, %v1045
  %v1054 = vadd.f32 %v1022, %v1046
  %v1055 = vadd.f32 %v1023, %v1047
  %v1056 = vadd.f32 %v1024, %v1048
  %v1058 = vperm.slane %v830, 0
  %v1060 = vadd.f32 %v1049, %v1058
  %v1061 = vadd.f32 %v1050, %v1058
  %v1062 = vadd.f32 %v1051, %v1058
  %v1063 = vadd.f32 %v1052, %v1058
  %v1064 = vadd.f32 %v1053, %v1058
  %v1065 = vadd.f32 %v1054, %v1058
  %v1066 = vadd.f32 %v1055, %v1058
  %v1067 = vadd.f32 %v1056, %v1058
  %vm1068 = vcmp.lt.s32.totalorder %v78, 8
  %v1069 = vsel %vm1068, %v1060, -3e+38
  %v1070 = vsel %vm1068, %v1061, -3e+38
  %v1071 = vsel %vm1068, %v1062, -3e+38
  %v1072 = vsel %vm1068, %v1063, -3e+38
  %v1073 = vsel %vm1068, %v1064, -3e+38
  %v1074 = vsel %vm1068, %v1065, -3e+38
  %v1075 = vsel %vm1068, %v1066, -3e+38
  %v1076 = vsel %vm1068, %v1067, -3e+38
  %1077 = vmax.xlane.f32.xlu0 %v1069
  %v1078 = vpop.xlane.xlu0 %1077
  %1079 = vmax.xlane.f32.xlu0 %v1070
  %v1080 = vpop.xlane.xlu0 %1079
  %1081 = vmax.xlane.f32.xlu0 %v1071
  %v1082 = vpop.xlane.xlu0 %1081
  %1083 = vmax.xlane.f32.xlu0 %v1072
  %v1084 = vpop.xlane.xlu0 %1083
  %1085 = vmax.xlane.f32.xlu0 %v1073
  %v1086 = vpop.xlane.xlu0 %1085
  %1087 = vmax.xlane.f32.xlu0 %v1074
  %v1088 = vpop.xlane.xlu0 %1087
  %1089 = vmax.xlane.f32.xlu0 %v1075
  %v1090 = vpop.xlane.xlu0 %1089
  %1091 = vmax.xlane.f32.xlu0 %v1076
  %v1092 = vpop.xlane.xlu0 %1091
  %v1093 = vsub.f32 %v1060, %v1078
  %v1094 = vsub.f32 %v1061, %v1080
  %v1095 = vsub.f32 %v1062, %v1082
  %v1096 = vsub.f32 %v1063, %v1084
  %v1097 = vsub.f32 %v1064, %v1086
  %v1098 = vsub.f32 %v1065, %v1088
  %v1099 = vsub.f32 %v1066, %v1090
  %v1100 = vsub.f32 %v1067, %v1092
  %v1101 = vmul.f32 %v1093, 1.442695
  %v1102 = vpow.pop %v1101
  %v1103 = vmul.f32 %v1094, 1.442695
  %v1104 = vpow.pop %v1103
  %v1105 = vmul.f32 %v1095, 1.442695
  %v1106 = vpow.pop %v1105
  %v1107 = vmul.f32 %v1096, 1.442695
  %v1108 = vpow.pop %v1107
  %v1109 = vmul.f32 %v1097, 1.442695
  %v1110 = vpow.pop %v1109
  %v1111 = vmul.f32 %v1098, 1.442695
  %v1112 = vpow.pop %v1111
  %v1113 = vmul.f32 %v1099, 1.442695
  %v1114 = vpow.pop %v1113
  %v1115 = vmul.f32 %v1100, 1.442695
  %v1116 = vpow.pop %v1115
  %v1117 = vsel %vm1068, %v1102, 0.0
  %v1118 = vsel %vm1068, %v1104, 0.0
  %v1119 = vsel %vm1068, %v1106, 0.0
  %v1120 = vsel %vm1068, %v1108, 0.0
  %v1121 = vsel %vm1068, %v1110, 0.0
  %v1122 = vsel %vm1068, %v1112, 0.0
  %v1123 = vsel %vm1068, %v1114, 0.0
  %v1124 = vsel %vm1068, %v1116, 0.0
  %1125 = vadd.xlane.f32.xlu0 %v1117
  %v1126 = vpop.xlane.xlu0 %1125
  %1127 = vadd.xlane.f32.xlu0 %v1118
  %v1128 = vpop.xlane.xlu0 %1127
  %1129 = vadd.xlane.f32.xlu0 %v1119
  %v1130 = vpop.xlane.xlu0 %1129
  %1131 = vadd.xlane.f32.xlu0 %v1120
  %v1132 = vpop.xlane.xlu0 %1131
  %1133 = vadd.xlane.f32.xlu0 %v1121
  %v1134 = vpop.xlane.xlu0 %1133
  %1135 = vadd.xlane.f32.xlu0 %v1122
  %v1136 = vpop.xlane.xlu0 %1135
  %1137 = vadd.xlane.f32.xlu0 %v1123
  %v1138 = vpop.xlane.xlu0 %1137
  %1139 = vadd.xlane.f32.xlu0 %v1124
  %v1140 = vpop.xlane.xlu0 %1139
  %v1141 = vlog2.pop %v1126
  %v1142 = vmul.f32 %v1141, 0.6931472
  %v1143 = vlog2.pop %v1128
  %v1144 = vmul.f32 %v1143, 0.6931472
  %v1145 = vlog2.pop %v1130
  %v1146 = vmul.f32 %v1145, 0.6931472
  %v1147 = vlog2.pop %v1132
  %v1148 = vmul.f32 %v1147, 0.6931472
  %v1149 = vlog2.pop %v1134
  %v1150 = vmul.f32 %v1149, 0.6931472
  %v1151 = vlog2.pop %v1136
  %v1152 = vmul.f32 %v1151, 0.6931472
  %v1153 = vlog2.pop %v1138
  %v1154 = vmul.f32 %v1153, 0.6931472
  %v1155 = vlog2.pop %v1140
  %v1156 = vmul.f32 %v1155, 0.6931472
  %v1157 = vadd.f32 %v1142, %v1078
  %v1158 = vadd.f32 %v1144, %v1080
  %v1159 = vadd.f32 %v1146, %v1082
  %v1160 = vadd.f32 %v1148, %v1084
  %v1161 = vadd.f32 %v1150, %v1086
  %v1162 = vadd.f32 %v1152, %v1088
  %v1163 = vadd.f32 %v1154, %v1090
  %v1164 = vadd.f32 %v1156, %v1092
  %v1165 = vsub.f32 %v1060, %v1157
  %v1166 = vsub.f32 %v1061, %v1158
  %v1167 = vsub.f32 %v1062, %v1159
  %v1168 = vsub.f32 %v1063, %v1160
  %v1169 = vsub.f32 %v1064, %v1161
  %v1170 = vsub.f32 %v1065, %v1162
  %v1171 = vsub.f32 %v1066, %v1163
  %v1172 = vsub.f32 %v1067, %v1164
  %1173 = vst [vmem:[%s15] sm:$0xff] %v1165
  %1174 = vst [vmem:[%s15 + $0x8] sm:$0xff] %v1166
  %1175 = vst [vmem:[%s15 + $0x10] sm:$0xff] %v1167
  %1176 = vst [vmem:[%s15 + $0x18] sm:$0xff] %v1168
  %1177 = vst [vmem:[%s15 + $0x20] sm:$0xff] %v1169
  %1178 = vst [vmem:[%s15 + $0x28] sm:$0xff] %v1170
  %1179 = vst [vmem:[%s15 + $0x30] sm:$0xff] %v1171
  %1180 = vst [vmem:[%s15 + $0x38] sm:$0xff] %v1172
  // Predicated region
  $region62: #{graph_unet_forward.5} parent=0 // pred_check
    _
  $region63: #{graph_unet_forward.5} parent=0 // pred_check_branch
    %1182 = sbr.rel (0) target = $region65
  $region64: #{graph_unet_forward.5} parent=0 // pred_region
    _
  $region65: #{graph_unet_forward.5} parent=0 // pred_fallthru
    _
  // Predicated region
  $region66: #{graph_unet_forward.5} parent=0 // pred_check
    _
  $region67: #{graph_unet_forward.5} parent=0 // pred_check_branch
    %1184 = sbr.rel (0) target = $region69
  $region68: #{graph_unet_forward.5} parent=0 // pred_region
    _
  $region69: #{graph_unet_forward.5} parent=0 // pred_fallthru
    _

</llo_original>
